<compile_context>
chip_gen: v7x
topology: tpu7x:2x2x1
jax: 0.10.0
libtpu: 0.0.40
codegen_flags: <defaults>
</compile_context>

<pallas_src>
import functools

import jax
import jax.numpy as jnp
from jax.experimental import pallas as pl
from jax.experimental.pallas import tpu as pltpu


NODE_DIM_IN = 128
SC_DIM_HIDDEN = 128
NUM_RES_BLOCKS = 2
OUT_DIM = 14      # 7 * 2
OUT_PAD = 128     # lane-dense padded output width (single merged output slab)

# Lane regions inside the merged 128-lane output slab.
_U0, _N0, _U1, _N1 = 0, 32, 64, 96   # unnorm-x, norm-x, unnorm-y, norm-y


def _round_up(v, m):
    return ((v + m - 1) // m) * m


def _sidechain_kernel(num_res_blocks, compute_dtype,
                      s_cur_ref, s_init_ref, w_in_ref, b_in_ref,
                      w_res_ref, b_res_ref, w_out_ref, b_out_ref, out_ref):
    f32 = jnp.float32
    relu = lambda v: jnp.maximum(v, 0)

    def linear(act_f32, w, b):
        # MXU matmul with f32 accumulation; bias / residual adds stay in f32.
        return jnp.dot(act_f32.astype(compute_dtype), w,
                       preferred_element_type=f32) + b

    # Input projection as two K=C dots accumulating into one f32 result
    # (equivalent to the fused K=2C matmul, without a wrapper-side concat).
    xc = relu(s_cur_ref[...])                        # already compute_dtype
    xi = relu(s_init_ref[...])
    a = (jnp.dot(xc, w_in_ref[0], preferred_element_type=f32)
         + jnp.dot(xi, w_in_ref[1], preferred_element_type=f32)
         + b_in_ref[...])                            # [tm, H] f32

    # Residual blocks: a = a + Lin2(ReLU(Lin1(ReLU(a))))
    for i in range(num_res_blocks):
        h = linear(relu(a), w_res_ref[2 * i], b_res_ref[2 * i])
        h = linear(relu(h), w_res_ref[2 * i + 1], b_res_ref[2 * i + 1])
        a = a + h

    # Output layer into the de-interleaved / duplicated 128-lane layout:
    #   lanes [0:7)    x_k (unnorm)     lanes [32:39)  x_k (to be normalized)
    #   lanes [64:71)  y_k (unnorm)     lanes [96:103) y_k (to be normalized)
    out = linear(relu(a), w_out_ref[...], b_out_ref[...])   # [tm, 128] f32

    # Pair-wise L2 normalization: the pair partner sits exactly 64 lanes away,
    # so one XLU rotate-by-half + add gives sum of squares per pair.
    sq = out * out
    norm_sq = sq + pltpu.roll(sq, shift=OUT_PAD // 2, axis=1)
    inv = 1.0 / jnp.maximum(jnp.sqrt(norm_sq), 1e-12)   # torch F.normalize eps

    # Normalize only lanes [32:64) and [96:128) (bit 5 of the lane index set);
    # everything else keeps the unnormalized value (zero in the padding lanes).
    lane = jax.lax.broadcasted_iota(jnp.int32, (1, OUT_PAD), 1)
    norm_lanes = (lane & 32) != 0
    out_ref[...] = jnp.where(norm_lanes, out * inv, out).astype(out_ref.dtype)


def init_params(key, node_dim_in=NODE_DIM_IN, sc_dim_hidden=SC_DIM_HIDDEN,
                num_res_blocks=NUM_RES_BLOCKS, out_dim=OUT_DIM):
    """Deterministic synthetic parameters. Weights stored as [in, out] (W.T)."""
    params = []

    def lin(key, d_in, d_out):
        kw, kb = jax.random.split(key)
        scale = 1.0 / jnp.sqrt(jnp.float32(d_in))
        w = jax.random.uniform(kw, (d_in, d_out), jnp.float32, -scale, scale)
        b = jax.random.uniform(kb, (1, d_out), jnp.float32, -scale, scale)
        return w, b

    n_lin = 2 + 2 * num_res_blocks + 1
    keys = jax.random.split(key, n_lin)
    k = iter(keys)

    params += list(lin(next(k), node_dim_in, sc_dim_hidden))   # lin_s_cur
    params += list(lin(next(k), node_dim_in, sc_dim_hidden))   # lin_s_init
    for _ in range(num_res_blocks):
        params += list(lin(next(k), sc_dim_hidden, sc_dim_hidden))
        params += list(lin(next(k), sc_dim_hidden, sc_dim_hidden))
    params += list(lin(next(k), sc_dim_hidden, out_dim))        # out_layer
    return params


def _pack_params(params, num_res_blocks, compute_dtype):
    """Pack per-layer params into 6 kernel operands (stacked / padded)."""
    w_cur, b_cur, w_init, b_init = params[0:4]
    res = params[4:4 + 4 * num_res_blocks]
    w_out, b_out = params[-2:]
    out_dim = w_out.shape[1]
    n_pairs = out_dim // 2
    assert out_dim % 2 == 0 and n_pairs <= 32

    w_in = jnp.stack([w_cur, w_init], axis=0)                  # [2, C, H]
    b_in = (b_cur + b_init).astype(jnp.float32)                # [1, H] (fused)
    w_res = jnp.stack(res[0::2], axis=0)                       # [2*nrb, H, H]
    b_res = jnp.stack(res[1::2], axis=0).astype(jnp.float32)   # [2*nrb, 1, H]

    # De-interleaved + duplicated output packing (see kernel comment).
    H = w_out.shape[0]
    wx, wy = w_out[:, 0::2], w_out[:, 1::2]                    # [H, 7] each
    bx, by = b_out[:, 0::2], b_out[:, 1::2]
    w_out_p = jnp.zeros((H, OUT_PAD), w_out.dtype)
    b_out_p = jnp.zeros((1, OUT_PAD), jnp.float32)
    for base, wc, bc in ((_U0, wx, bx), (_N0, wx, bx), (_U1, wy, by), (_N1, wy, by)):
        w_out_p = w_out_p.at[:, base:base + n_pairs].set(wc)
        b_out_p = b_out_p.at[:, base:base + n_pairs].set(bc.astype(jnp.float32))

    cast = lambda w: w.astype(compute_dtype)
    return (cast(w_in), b_in, cast(w_res), b_res,
            cast(w_out_p), b_out_p), out_dim


def sidechain_forward(s_cur, s_init, rot, tran, params,
                      num_res_blocks=NUM_RES_BLOCKS, tm=1024,
                      compute_dtype=jnp.bfloat16, out_dtype=jnp.float32):
    """Returns (a_norm [B,N,7,2], a_unnorm [B,N,7,2]); rot/tran unused (as in ref)."""
    del rot, tran  # unused by the reference forward
    B, N, C = s_cur.shape
    nrb = num_res_blocks
    M = B * N

    packed, out_dim = _pack_params(params, nrb, compute_dtype)
    w_in, b_in, w_res, b_res, w_out_p, b_out_p = packed
    H = w_in.shape[-1]
    n_pairs = out_dim // 2

    # Row-tiled inputs, cast to the MXU input dtype in the wrapper so bf16 also
    # halves the per-step x-tile DMA bytes.
    xc = s_cur.reshape(M, C).astype(compute_dtype)
    xi = s_init.reshape(M, C).astype(compute_dtype)

    # Row-tile sizing: multiple of the native sublane tile for the input dtype,
    # clamped to the problem, and capped so the parallel grid keeps >=2 steps
    # where possible (v7x has 2 TensorCores per chip).
    row_mult = max(8, 32 // jnp.dtype(compute_dtype).itemsize)
    tm = max(row_mult, min(_round_up(tm, row_mult), _round_up(M, row_mult)))
    if _round_up(M, row_mult) >= 2 * row_mult:
        tm = min(tm, _round_up(pl.cdiv(M, 2), row_mult))
    M_pad = _round_up(M, tm)
    if M_pad != M:
        xc = jnp.pad(xc, ((0, M_pad - M), (0, 0)))
        xi = jnp.pad(xi, ((0, M_pad - M), (0, 0)))
    grid = (M_pad // tm,)

    row_in = pl.BlockSpec((tm, C), lambda i: (i, 0))
    const = lambda shape: pl.BlockSpec(shape, lambda i, _n=len(shape): (0,) * _n)

    in_specs = [
        row_in, row_in,               # s_cur / s_init row tiles
        const((2, C, H)),             # stacked input-projection weights
        const((1, H)),                # fused input bias
        const((2 * nrb, H, H)),       # stacked residual weights
        const((2 * nrb, 1, H)),       # stacked residual biases
        const((H, OUT_PAD)),          # packed output weights
        const((1, OUT_PAD)),          # packed output bias
    ]
    out_specs = pl.BlockSpec((tm, OUT_PAD), lambda i: (i, 0))
    out_shape = jax.ShapeDtypeStruct((M_pad, OUT_PAD), out_dtype)

    itembytes = lambda a: a.size * a.dtype.itemsize
    flops = 2 * M_pad * (2 * C * H + 2 * nrb * H * H + H * OUT_PAD)
    bytes_accessed = int(itembytes(xc) + itembytes(xi)
                         + sum(itembytes(a) for a in packed)
                         + M_pad * OUT_PAD * jnp.dtype(out_dtype).itemsize)
    cost = pl.CostEstimate(flops=flops, transcendentals=M_pad * OUT_PAD,
                           bytes_accessed=bytes_accessed)

    kernel = functools.partial(_sidechain_kernel, nrb, compute_dtype)

    o = pl.pallas_call(
        kernel,
        out_shape=out_shape,
        grid=grid,
        in_specs=in_specs,
        out_specs=out_specs,
        compiler_params=pltpu.CompilerParams(
            dimension_semantics=("parallel",)),
        cost_estimate=cost,
    )(xc, xi, w_in, b_in, w_res, b_res, w_out_p, b_out_p)

    # Drop row padding; reassemble the interleaved [..., 7, 2] views.
    o = o[:M].astype(jnp.float32)
    a_unnorm = jnp.stack([o[:, _U0:_U0 + n_pairs], o[:, _U1:_U1 + n_pairs]], axis=-1)
    a_norm = jnp.stack([o[:, _N0:_N0 + n_pairs], o[:, _N1:_N1 + n_pairs]], axis=-1)
    return (a_norm.reshape(B, N, n_pairs, 2),
            a_unnorm.reshape(B, N, n_pairs, 2))


def _reference_forward(s_cur, s_init, params, num_res_blocks=NUM_RES_BLOCKS,
                       compute_dtype=jnp.float32):
    """Pure-JAX reference (matches the PyTorch module). compute_dtype=bf16
    emulates the kernel's bf16-input / f32-accumulate MXU path."""
    f32 = jnp.float32
    relu = lambda v: jnp.maximum(v, 0)
    q = lambda v: v.astype(compute_dtype)

    def lin(x, w, b):
        return (jnp.dot(q(x), q(w), preferred_element_type=f32,
                        precision=jax.lax.Precision.HIGHEST)
                + b.astype(f32))

    a = (lin(relu(q(s_cur)).astype(f32), params[0], params[1])
         + lin(relu(q(s_init)).astype(f32), params[2], params[3]))
    res = params[4:4 + 4 * num_res_blocks]
    for i in range(num_res_blocks):
        w1, b1, w2, b2 = res[4 * i:4 * i + 4]
        a = a + lin(relu(lin(relu(a), w1, b1)), w2, b2)
    out = lin(relu(a), params[-2], params[-1])
    B, N = s_cur.shape[:2]
    un = out.reshape(B, N, out.shape[-1] // 2, 2)
    nrm = jnp.sqrt(jnp.sum(un * un, axis=-1, keepdims=True))
    return un / jnp.maximum(nrm, 1e-12), un


if __name__ == "__main__":
    key = jax.random.PRNGKey(0)
    k_par, k_cur, k_init, k_rot, k_tran = jax.random.split(key, 5)
    params = init_params(k_par)

    for (B, N) in ((2, 8), (2, 13)):   # second shape exercises row padding
        kc = jax.random.fold_in(k_cur, N)
        ki = jax.random.fold_in(k_init, N)
        s_cur = jax.random.normal(kc, (B, N, NODE_DIM_IN), jnp.float32)
        s_init = jax.random.normal(ki, (B, N, NODE_DIM_IN), jnp.float32)
        rot = jax.random.normal(k_rot, (B, N, 3, 3), jnp.float32)
        tran = jax.random.normal(k_tran, (B, N, 1, 3), jnp.float32)

        # f32 MXU path: tight check against the exact reference.
        a_norm, a_unnorm = sidechain_forward(s_cur, s_init, rot, tran, params,
                                             compute_dtype=jnp.float32)
        jax.block_until_ready((a_norm, a_unnorm))
        assert a_norm.shape == (B, N, 7, 2) and a_unnorm.shape == (B, N, 7, 2)
        r_norm, r_unnorm = _reference_forward(s_cur, s_init, params)
        assert jnp.allclose(a_unnorm, r_unnorm, rtol=1e-3, atol=1e-3)
        assert jnp.allclose(a_norm, r_norm, rtol=1e-3, atol=1e-3)

        # bf16 MXU path (performance default) vs a bf16-emulating reference.
        b_norm, b_unnorm = sidechain_forward(s_cur, s_init, rot, tran, params)
        jax.block_until_ready((b_norm, b_unnorm))
        rb_norm, rb_unnorm = _reference_forward(s_cur, s_init, params,
                                                compute_dtype=jnp.bfloat16)
        assert b_norm.shape == (B, N, 7, 2) and b_unnorm.shape == (B, N, 7, 2)
        assert jnp.allclose(b_unnorm, rb_unnorm, rtol=2e-2, atol=2e-2)
        assert jnp.allclose(b_norm, rb_norm, rtol=2e-2, atol=2e-2)

    print("KERNEL_OK")
</pallas_src>

<mosaic_0001>
module attributes {stable_mosaic.version = 11 : i64} {
  func.func @_sidechain_kernel(%arg0: i32, %arg1: memref<8x128xf32, #tpu.memory_space<vmem>>, %arg2: memref<8x128xf32, #tpu.memory_space<vmem>>, %arg3: memref<2x128x128xf32, #tpu.memory_space<vmem>>, %arg4: memref<1x128xf32, #tpu.memory_space<vmem>>, %arg5: memref<4x128x128xf32, #tpu.memory_space<vmem>>, %arg6: memref<4x1x128xf32, #tpu.memory_space<vmem>>, %arg7: memref<128x128xf32, #tpu.memory_space<vmem>>, %arg8: memref<1x128xf32, #tpu.memory_space<vmem>>, %arg9: memref<8x128xf32, #tpu.memory_space<vmem>>) attributes {dimension_semantics = [#tpu.dimension_semantics<parallel>], iteration_bounds = array<i64: 2>, scalar_prefetch = 0 : i64, scratch_operands = 0 : i64, tpu.core_type = #tpu.core_type<tc>, window_params = [{transform_indices = @transform_0, window_bounds = array<i64: 8, 128>}, {transform_indices = @transform_1, window_bounds = array<i64: 8, 128>}, {pipeline_mode = #tpu.pipeline_mode<synchronous>, transform_indices = @transform_2, window_bounds = array<i64: 2, 128, 128>}, {pipeline_mode = #tpu.pipeline_mode<synchronous>, transform_indices = @transform_3, window_bounds = array<i64: 1, 128>}, {pipeline_mode = #tpu.pipeline_mode<synchronous>, transform_indices = @transform_4, window_bounds = array<i64: 4, 128, 128>}, {pipeline_mode = #tpu.pipeline_mode<synchronous>, transform_indices = @transform_5, window_bounds = array<i64: 4, 1, 128>}, {pipeline_mode = #tpu.pipeline_mode<synchronous>, transform_indices = @transform_6, window_bounds = array<i64: 128, 128>}, {pipeline_mode = #tpu.pipeline_mode<synchronous>, transform_indices = @transform_7, window_bounds = array<i64: 1, 128>}, {transform_indices = @transform_8, window_bounds = array<i64: 8, 128>}]} {
    %c0 = arith.constant 0 : index
    %c0_0 = arith.constant 0 : index
    %0 = vector.load %arg1[%c0, %c0_0] : memref<8x128xf32, #tpu.memory_space<vmem>>, vector<8x128xf32>
    %cst = arith.constant 0.000000e+00 : f32
    %1 = vector.broadcast %cst : f32 to vector<8x128xf32>
    %2 = arith.maximumf %0, %1 : vector<8x128xf32>
    %c0_1 = arith.constant 0 : index
    %c0_2 = arith.constant 0 : index
    %3 = vector.load %arg2[%c0_1, %c0_2] : memref<8x128xf32, #tpu.memory_space<vmem>>, vector<8x128xf32>
    %cst_3 = arith.constant 0.000000e+00 : f32
    %4 = vector.broadcast %cst_3 : f32 to vector<8x128xf32>
    %5 = arith.maximumf %3, %4 : vector<8x128xf32>
    %c0_4 = arith.constant 0 : index
    %c0_5 = arith.constant 0 : index
    %c0_6 = arith.constant 0 : index
    %6 = vector.load %arg3[%c0_4, %c0_5, %c0_6] : memref<2x128x128xf32, #tpu.memory_space<vmem>>, vector<1x128x128xf32>
    %7 = vector.shape_cast %6 : vector<1x128x128xf32> to vector<128x128xf32>
    %cst_7 = arith.constant dense<0.000000e+00> : vector<8x128xf32>
    %8 = tpu.matmul %2, %7, %cst_7 {dimension_numbers = #tpu.dot_dimension_numbers<[1], [0], [0], [1], [0, 0, 1, 1], [], []>} : vector<8x128xf32>, vector<128x128xf32>, vector<8x128xf32> -> vector<8x128xf32>
    %c1 = arith.constant 1 : index
    %c0_8 = arith.constant 0 : index
    %c0_9 = arith.constant 0 : index
    %9 = vector.load %arg3[%c1, %c0_8, %c0_9] : memref<2x128x128xf32, #tpu.memory_space<vmem>>, vector<1x128x128xf32>
    %10 = vector.shape_cast %9 : vector<1x128x128xf32> to vector<128x128xf32>
    %cst_10 = arith.constant dense<0.000000e+00> : vector<8x128xf32>
    %11 = tpu.matmul %5, %10, %cst_10 {dimension_numbers = #tpu.dot_dimension_numbers<[1], [0], [0], [1], [0, 0, 1, 1], [], []>} : vector<8x128xf32>, vector<128x128xf32>, vector<8x128xf32> -> vector<8x128xf32>
    %12 = arith.addf %8, %11 : vector<8x128xf32>
    %c0_11 = arith.constant 0 : index
    %c0_12 = arith.constant 0 : index
    %13 = vector.load %arg4[%c0_11, %c0_12] : memref<1x128xf32, #tpu.memory_space<vmem>>, vector<1x128xf32>
    %14 = vector.broadcast %13 : vector<1x128xf32> to vector<8x128xf32>
    %15 = arith.addf %12, %14 : vector<8x128xf32>
    %cst_13 = arith.constant 0.000000e+00 : f32
    %16 = vector.broadcast %cst_13 : f32 to vector<8x128xf32>
    %17 = arith.maximumf %15, %16 : vector<8x128xf32>
    %c0_14 = arith.constant 0 : index
    %c0_15 = arith.constant 0 : index
    %c0_16 = arith.constant 0 : index
    %18 = vector.load %arg5[%c0_14, %c0_15, %c0_16] : memref<4x128x128xf32, #tpu.memory_space<vmem>>, vector<1x128x128xf32>
    %19 = vector.shape_cast %18 : vector<1x128x128xf32> to vector<128x128xf32>
    %c0_17 = arith.constant 0 : index
    %c0_18 = arith.constant 0 : index
    %c0_19 = arith.constant 0 : index
    %20 = vector.load %arg6[%c0_17, %c0_18, %c0_19] : memref<4x1x128xf32, #tpu.memory_space<vmem>>, vector<1x1x128xf32>
    %21 = vector.shape_cast %20 : vector<1x1x128xf32> to vector<1x128xf32>
    %cst_20 = arith.constant dense<0.000000e+00> : vector<8x128xf32>
    %22 = tpu.matmul %17, %19, %cst_20 {dimension_numbers = #tpu.dot_dimension_numbers<[1], [0], [0], [1], [0, 0, 1, 1], [], []>} : vector<8x128xf32>, vector<128x128xf32>, vector<8x128xf32> -> vector<8x128xf32>
    %23 = vector.broadcast %21 : vector<1x128xf32> to vector<8x128xf32>
    %24 = arith.addf %22, %23 : vector<8x128xf32>
    %cst_21 = arith.constant 0.000000e+00 : f32
    %25 = vector.broadcast %cst_21 : f32 to vector<8x128xf32>
    %26 = arith.maximumf %24, %25 : vector<8x128xf32>
    %c1_22 = arith.constant 1 : index
    %c0_23 = arith.constant 0 : index
    %c0_24 = arith.constant 0 : index
    %27 = vector.load %arg5[%c1_22, %c0_23, %c0_24] : memref<4x128x128xf32, #tpu.memory_space<vmem>>, vector<1x128x128xf32>
    %28 = vector.shape_cast %27 : vector<1x128x128xf32> to vector<128x128xf32>
    %c1_25 = arith.constant 1 : index
    %c0_26 = arith.constant 0 : index
    %c0_27 = arith.constant 0 : index
    %29 = vector.load %arg6[%c1_25, %c0_26, %c0_27] : memref<4x1x128xf32, #tpu.memory_space<vmem>>, vector<1x1x128xf32>
    %30 = vector.shape_cast %29 : vector<1x1x128xf32> to vector<1x128xf32>
    %cst_28 = arith.constant dense<0.000000e+00> : vector<8x128xf32>
    %31 = tpu.matmul %26, %28, %cst_28 {dimension_numbers = #tpu.dot_dimension_numbers<[1], [0], [0], [1], [0, 0, 1, 1], [], []>} : vector<8x128xf32>, vector<128x128xf32>, vector<8x128xf32> -> vector<8x128xf32>
    %32 = vector.broadcast %30 : vector<1x128xf32> to vector<8x128xf32>
    %33 = arith.addf %31, %32 : vector<8x128xf32>
    %34 = arith.addf %15, %33 : vector<8x128xf32>
    %cst_29 = arith.constant 0.000000e+00 : f32
    %35 = vector.broadcast %cst_29 : f32 to vector<8x128xf32>
    %36 = arith.maximumf %34, %35 : vector<8x128xf32>
    %c2 = arith.constant 2 : index
    %c0_30 = arith.constant 0 : index
    %c0_31 = arith.constant 0 : index
    %37 = vector.load %arg5[%c2, %c0_30, %c0_31] : memref<4x128x128xf32, #tpu.memory_space<vmem>>, vector<1x128x128xf32>
    %38 = vector.shape_cast %37 : vector<1x128x128xf32> to vector<128x128xf32>
    %c2_32 = arith.constant 2 : index
    %c0_33 = arith.constant 0 : index
    %c0_34 = arith.constant 0 : index
    %39 = vector.load %arg6[%c2_32, %c0_33, %c0_34] : memref<4x1x128xf32, #tpu.memory_space<vmem>>, vector<1x1x128xf32>
    %40 = vector.shape_cast %39 : vector<1x1x128xf32> to vector<1x128xf32>
    %cst_35 = arith.constant dense<0.000000e+00> : vector<8x128xf32>
    %41 = tpu.matmul %36, %38, %cst_35 {dimension_numbers = #tpu.dot_dimension_numbers<[1], [0], [0], [1], [0, 0, 1, 1], [], []>} : vector<8x128xf32>, vector<128x128xf32>, vector<8x128xf32> -> vector<8x128xf32>
    %42 = vector.broadcast %40 : vector<1x128xf32> to vector<8x128xf32>
    %43 = arith.addf %41, %42 : vector<8x128xf32>
    %cst_36 = arith.constant 0.000000e+00 : f32
    %44 = vector.broadcast %cst_36 : f32 to vector<8x128xf32>
    %45 = arith.maximumf %43, %44 : vector<8x128xf32>
    %c3 = arith.constant 3 : index
    %c0_37 = arith.constant 0 : index
    %c0_38 = arith.constant 0 : index
    %46 = vector.load %arg5[%c3, %c0_37, %c0_38] : memref<4x128x128xf32, #tpu.memory_space<vmem>>, vector<1x128x128xf32>
    %47 = vector.shape_cast %46 : vector<1x128x128xf32> to vector<128x128xf32>
    %c3_39 = arith.constant 3 : index
    %c0_40 = arith.constant 0 : index
    %c0_41 = arith.constant 0 : index
    %48 = vector.load %arg6[%c3_39, %c0_40, %c0_41] : memref<4x1x128xf32, #tpu.memory_space<vmem>>, vector<1x1x128xf32>
    %49 = vector.shape_cast %48 : vector<1x1x128xf32> to vector<1x128xf32>
    %cst_42 = arith.constant dense<0.000000e+00> : vector<8x128xf32>
    %50 = tpu.matmul %45, %47, %cst_42 {dimension_numbers = #tpu.dot_dimension_numbers<[1], [0], [0], [1], [0, 0, 1, 1], [], []>} : vector<8x128xf32>, vector<128x128xf32>, vector<8x128xf32> -> vector<8x128xf32>
    %51 = vector.broadcast %49 : vector<1x128xf32> to vector<8x128xf32>
    %52 = arith.addf %50, %51 : vector<8x128xf32>
    %53 = arith.addf %34, %52 : vector<8x128xf32>
    %cst_43 = arith.constant 0.000000e+00 : f32
    %54 = vector.broadcast %cst_43 : f32 to vector<8x128xf32>
    %55 = arith.maximumf %53, %54 : vector<8x128xf32>
    %c0_44 = arith.constant 0 : index
    %c0_45 = arith.constant 0 : index
    %56 = vector.load %arg7[%c0_44, %c0_45] : memref<128x128xf32, #tpu.memory_space<vmem>>, vector<128x128xf32>
    %c0_46 = arith.constant 0 : index
    %c0_47 = arith.constant 0 : index
    %57 = vector.load %arg8[%c0_46, %c0_47] : memref<1x128xf32, #tpu.memory_space<vmem>>, vector<1x128xf32>
    %cst_48 = arith.constant dense<0.000000e+00> : vector<8x128xf32>
    %58 = tpu.matmul %55, %56, %cst_48 {dimension_numbers = #tpu.dot_dimension_numbers<[1], [0], [0], [1], [0, 0, 1, 1], [], []>} : vector<8x128xf32>, vector<128x128xf32>, vector<8x128xf32> -> vector<8x128xf32>
    %59 = vector.broadcast %57 : vector<1x128xf32> to vector<8x128xf32>
    %60 = arith.addf %58, %59 : vector<8x128xf32>
    %61 = arith.mulf %60, %60 : vector<8x128xf32>
    %c64_i32 = arith.constant 64 : i32
    %62 = tpu.dynamic_rotate %61 by %c64_i32 dim 1 : vector<8x128xf32>, i32 -> vector<8x128xf32>
    %63 = arith.addf %61, %62 : vector<8x128xf32>
    %64 = math.sqrt %63 : vector<8x128xf32>
    %cst_49 = arith.constant 9.99999996E-13 : f32
    %65 = vector.broadcast %cst_49 : f32 to vector<8x128xf32>
    %66 = arith.maximumf %64, %65 : vector<8x128xf32>
    %cst_50 = arith.constant 1.000000e+00 : f32
    %67 = vector.broadcast %cst_50 : f32 to vector<8x128xf32>
    %68 = arith.divf %67, %66 : vector<8x128xf32>
    %69 = tpu.iota {dimensions = array<i32: 1>} : vector<1x128xi32>
    %c32_i32 = arith.constant 32 : i32
    %70 = vector.broadcast %c32_i32 : i32 to vector<1x128xi32>
    %71 = arith.andi %69, %70 : vector<1x128xi32>
    %c0_i32 = arith.constant 0 : i32
    %72 = vector.broadcast %c0_i32 : i32 to vector<1x128xi32>
    %73 = arith.cmpi ne, %71, %72 : vector<1x128xi32>
    %74 = arith.mulf %60, %68 : vector<8x128xf32>
    %75 = vector.shape_cast %73 : vector<1x128xi1> to vector<1x128xi1>
    %76 = vector.broadcast %75 : vector<1x128xi1> to vector<8x128xi1>
    %77 = arith.select %76, %74, %60 : vector<8x128xi1>, vector<8x128xf32>
    %c0_51 = arith.constant 0 : index
    %c0_52 = arith.constant 0 : index
    %78 = vector.load %arg9[%c0_51, %c0_52] : memref<8x128xf32, #tpu.memory_space<vmem>>, vector<8x128xf32>
    tpu.vector_store %arg9[%c0_51, %c0_52], %77 {strides = array<i32>} : memref<8x128xf32, #tpu.memory_space<vmem>>, vector<8x128xf32>,
    return
  }
  func.func @transform_0(%arg0: i32) -> (i32, i32) {
    %c0_i32 = arith.constant 0 : i32
    %c0_i32_0 = arith.constant 0 : i32
    return %arg0, %c0_i32 : i32, i32
  }
  func.func @transform_1(%arg0: i32) -> (i32, i32) {
    %c0_i32 = arith.constant 0 : i32
    %c0_i32_0 = arith.constant 0 : i32
    return %arg0, %c0_i32 : i32, i32
  }
  func.func @transform_2(%arg0: i32) -> (i32, i32, i32) {
    %c0_i32 = arith.constant 0 : i32
    %c0_i32_0 = arith.constant 0 : i32
    %c0_i32_1 = arith.constant 0 : i32
    %c0_i32_2 = arith.constant 0 : i32
    return %c0_i32, %c0_i32_0, %c0_i32_1 : i32, i32, i32
  }
  func.func @transform_3(%arg0: i32) -> (i32, i32) {
    %c0_i32 = arith.constant 0 : i32
    %c0_i32_0 = arith.constant 0 : i32
    %c0_i32_1 = arith.constant 0 : i32
    return %c0_i32, %c0_i32_0 : i32, i32
  }
  func.func @transform_4(%arg0: i32) -> (i32, i32, i32) {
    %c0_i32 = arith.constant 0 : i32
    %c0_i32_0 = arith.constant 0 : i32
    %c0_i32_1 = arith.constant 0 : i32
    %c0_i32_2 = arith.constant 0 : i32
    return %c0_i32, %c0_i32_0, %c0_i32_1 : i32, i32, i32
  }
  func.func @transform_5(%arg0: i32) -> (i32, i32, i32) {
    %c0_i32 = arith.constant 0 : i32
    %c0_i32_0 = arith.constant 0 : i32
    %c0_i32_1 = arith.constant 0 : i32
    %c0_i32_2 = arith.constant 0 : i32
    return %c0_i32, %c0_i32_0, %c0_i32_1 : i32, i32, i32
  }
  func.func @transform_6(%arg0: i32) -> (i32, i32) {
    %c0_i32 = arith.constant 0 : i32
    %c0_i32_0 = arith.constant 0 : i32
    %c0_i32_1 = arith.constant 0 : i32
    return %c0_i32, %c0_i32_0 : i32, i32
  }
  func.func @transform_7(%arg0: i32) -> (i32, i32) {
    %c0_i32 = arith.constant 0 : i32
    %c0_i32_0 = arith.constant 0 : i32
    %c0_i32_1 = arith.constant 0 : i32
    return %c0_i32, %c0_i32_0 : i32, i32
  }
  func.func @transform_8(%arg0: i32) -> (i32, i32) {
    %c0_i32 = arith.constant 0 : i32
    %c0_i32_0 = arith.constant 0 : i32
    return %arg0, %c0_i32 : i32, i32
  }
}

</mosaic_0001>

<llo_original>
// kernel: tpu_custom_call.1
$region0: #{tpu_custom_call.1}
  #allocation0 [shape = 'u32[]', space=smem, size = 0x4, offset = 0x4, fixed_abs, tag = 'smem constant byte address 0x4 - core index']
  #allocation1 [shape = 'u32[144,128]{1,0:T(1,128)}', space=vmem, size = 0x12000, scoped, tag = 'internal scratch']
  %s0 = inlined_call_operand.hbm [shape: f32[16,128], index: 0, kind: input, shape index: {}]
  %s1 = inlined_call_operand.hbm [shape: f32[16,128], index: 1, kind: input, shape index: {}]
  %s2 = inlined_call_operand.hbm [shape: f32[2,128,128], index: 2, kind: input, shape index: {}]
  %s3 = inlined_call_operand.vmem [shape: f32[1,128], index: 3, kind: input, shape index: {}]
  %s4 = inlined_call_operand.hbm [shape: f32[4,128,128], index: 4, kind: input, shape index: {}]
  %s5 = inlined_call_operand.vmem [shape: f32[4,1,128], index: 5, kind: input, shape index: {}]
  %s6 = inlined_call_operand.hbm [shape: f32[128,128], index: 6, kind: input, shape index: {}]
  %s7 = inlined_call_operand.vmem [shape: f32[1,128], index: 7, kind: input, shape index: {}]
  %s8 = inlined_call_operand.hbm [shape: f32[16,128], index: 8, kind: output, shape index: {}]
  %s9 = sld [smem:[#allocation0]]
  $region85: #{tpu_custom_call.1} parent=0
    _
  %s11 = ssub.s32 1, %s9
  %s12 = scalar_select 0, %s11, %s9
  $region1: #{tpu_custom_call.1} parent=0
    #allocation2 [shape = 'u8[8192]{0}', space=vmem, size = 0x2000, scoped, tag = 'input window, operand 0']
    #allocation3 [shape = 's32[2]{0}', space=sflag, size = 0x8, scoped, tag = 'scoped memory for tpu_custom_call.1']
    #allocation4 [shape = 's32[2]{0}', space=sflag, size = 0x8, scoped, tag = 'scoped memory for tpu_custom_call.1']
    #allocation5 [shape = 'u8[8192]{0}', space=vmem, size = 0x2000, scoped, tag = 'input window, operand 1']
    #allocation6 [shape = 's32[2]{0}', space=sflag, size = 0x8, scoped, tag = 'scoped memory for tpu_custom_call.1']
    #allocation7 [shape = 'u8[131072]{0}', space=vmem, size = 0x20000, scoped, tag = 'input window, operand 2, single buffered']
    #allocation8 [shape = 'u8[262144]{0}', space=vmem, size = 0x40000, scoped, tag = 'input window, operand 4, single buffered']
    #allocation9 [shape = 's32[1]{0}', space=sflag, size = 0x4, scoped, tag = 'scoped memory for tpu_custom_call.1']
    #allocation10 [shape = 'u8[65536]{0}', space=vmem, size = 0x10000, scoped, tag = 'input window, operand 6, single buffered']
    #allocation11 [shape = 'u8[8192]{0}', space=vmem, size = 0x2000, scoped, tag = 'output window, operand 0']
    %13 = vsyncpa [#allocation3], 0
    %s14 = scalar_lea.sflag [#allocation3], 1
    %15 = vsyncpa %s14, 0
    %16 = vsyncpa [#allocation6], 0
    %s17 = scalar_lea.sflag [#allocation6], 1
    %18 = vsyncpa %s17, 0
    %19 = vsyncpa [#allocation9], 0
    %20 = vsyncpa [#allocation4], 0
    %s21 = scalar_lea.sflag [#allocation4], 1
    %22 = vsyncpa %s21, 0
    loop: start=0, step=1, limit=4
    $region2: #{tpu_custom_call.1} parent=1 // loop_pre_header
      _
    $region3: #{tpu_custom_call.1} parent=1 // loop_header
      %s24 = sphi 0, %s28
      %p25 = scmp.ge.s32.totalorder %s24, 4
      %s34 = sphi 0, %s36
      %s37 = sphi 0, %s34
      %s38 = sphi 0, %s37
      %s54 = sphi 0, %s38
      %s60 = sphi 0, %s62
      %s63 = sphi 0, %s60
      %s64 = sphi 0, %s63
      %s80 = sphi 0, %s64
      %s84 = sphi 0, %s84
      %s86 = sphi 0, %s84
      %s87 = sphi 0, %s86
      %s101 = sphi 0, %s87
      %s105 = sphi 0, %s105
      %s107 = sphi 0, %s105
      %s108 = sphi 0, %s107
      %s122 = sphi 0, %s108
      %s126 = sphi 0, %s126
      %s128 = sphi 0, %s126
      %s129 = sphi 0, %s128
      %s143 = sphi 0, %s129
      %s147 = sphi 0, %s147
      %s149 = sphi 0, %s147
      %s150 = sphi 0, %s149
      %s164 = sphi 0, %s150
      %s168 = sphi 0, %s168
      %s170 = sphi 0, %s168
      %s171 = sphi 0, %s170
      %s185 = sphi 0, %s171
      %s189 = sphi 0, %s189
      %s191 = sphi 0, %s189
      %s192 = sphi 0, %s191
      %s206 = sphi 0, %s192
      %s212 = sphi 0, %s214
      %s215 = sphi 0, %s212
      %s216 = sphi 0, %s215
      %s232 = sphi 0, %s216
    $region4: #{tpu_custom_call.1} parent=1 // loop_header_branch
      %27 = sbr.rel (%p25) target = $region8
    $region5: #{tpu_custom_call.1} parent=1 // loop_body
      %s29 = ssub.s32 %s24, 1
      %s30 = ssub.s32 %s24, 2
      %s31 = sadd.s32 %s24, 1
      %s32 = ssub.s32 %s24, %s31
      %p33 = scmp.eq.s32.totalorder %s32, 0
      %s35 = sadd.s32 %s34, 1
      %s36 = scalar_select %p33, %s34, %s35
      %p39 = pneg %p33
      %p40 = scmp.eq.s32.totalorder %s24, 1
      %p41 = por %p39, %p40
      %p42 = scmp.ne.s32.totalorder %s34, %s37
      %p43 = scmp.eq.s32.totalorder %s24, 0
      %p44 = por %p42, %p43
      %p45 = scmp.ne.s32.totalorder %s34, %s37
      %p46 = scmp.eq.s32.totalorder %s29, 1
      %p47 = por %p45, %p46
      %p48 = scmp.ne.s32.totalorder %s37, %s38
      %p49 = scmp.eq.s32.totalorder %s29, 0
      %p50 = por %p48, %p49
      %p51 = scmp.ne.s32.totalorder %s37, %s38
      %p52 = scmp.eq.s32.totalorder %s30, 1
      %p53 = por %p51, %p52
      %p55 = scmp.ne.s32.totalorder %s38, %s54
      %p56 = scmp.eq.s32.totalorder %s30, 0
      %p57 = por %p55, %p56
      %s58 = ssub.s32 %s24, %s31
      %p59 = scmp.eq.s32.totalorder %s58, 0
      %s61 = sadd.s32 %s60, 1
      %s62 = scalar_select %p59, %s60, %s61
      %p65 = pneg %p59
      %p66 = scmp.eq.s32.totalorder %s24, 1
      %p67 = por %p65, %p66
      %p68 = scmp.ne.s32.totalorder %s60, %s63
      %p69 = scmp.eq.s32.totalorder %s24, 0
      %p70 = por %p68, %p69
      %p71 = scmp.ne.s32.totalorder %s60, %s63
      %p72 = scmp.eq.s32.totalorder %s29, 1
      %p73 = por %p71, %p72
      %p74 = scmp.ne.s32.totalorder %s63, %s64
      %p75 = scmp.eq.s32.totalorder %s29, 0
      %p76 = por %p74, %p75
      %p77 = scmp.ne.s32.totalorder %s63, %s64
      %p78 = scmp.eq.s32.totalorder %s30, 1
      %p79 = por %p77, %p78
      %p81 = scmp.ne.s32.totalorder %s64, %s80
      %p82 = scmp.eq.s32.totalorder %s30, 0
      %p83 = por %p81, %p82
      %s85 = sadd.s32 %s84, 1
      %p88 = scmp.eq.s32.totalorder %s24, 1
      %p89 = scmp.ne.s32.totalorder %s84, %s86
      %p90 = scmp.eq.s32.totalorder %s24, 0
      %p91 = por %p89, %p90
      %p92 = scmp.ne.s32.totalorder %s84, %s86
      %p93 = scmp.eq.s32.totalorder %s29, 1
      %p94 = por %p92, %p93
      %p95 = scmp.ne.s32.totalorder %s86, %s87
      %p96 = scmp.eq.s32.totalorder %s29, 0
      %p97 = por %p95, %p96
      %p98 = scmp.ne.s32.totalorder %s86, %s87
      %p99 = scmp.eq.s32.totalorder %s30, 1
      %p100 = por %p98, %p99
      %p102 = scmp.ne.s32.totalorder %s87, %s101
      %p103 = scmp.eq.s32.totalorder %s30, 0
      %p104 = por %p102, %p103
      %s106 = sadd.s32 %s105, 1
      %p109 = scmp.eq.s32.totalorder %s24, 1
      %p110 = scmp.ne.s32.totalorder %s105, %s107
      %p111 = scmp.eq.s32.totalorder %s24, 0
      %p112 = por %p110, %p111
      %p113 = scmp.ne.s32.totalorder %s105, %s107
      %p114 = scmp.eq.s32.totalorder %s29, 1
      %p115 = por %p113, %p114
      %p116 = scmp.ne.s32.totalorder %s107, %s108
      %p117 = scmp.eq.s32.totalorder %s29, 0
      %p118 = por %p116, %p117
      %p119 = scmp.ne.s32.totalorder %s107, %s108
      %p120 = scmp.eq.s32.totalorder %s30, 1
      %p121 = por %p119, %p120
      %p123 = scmp.ne.s32.totalorder %s108, %s122
      %p124 = scmp.eq.s32.totalorder %s30, 0
      %p125 = por %p123, %p124
      %s127 = sadd.s32 %s126, 1
      %p130 = scmp.eq.s32.totalorder %s24, 1
      %p131 = scmp.ne.s32.totalorder %s126, %s128
      %p132 = scmp.eq.s32.totalorder %s24, 0
      %p133 = por %p131, %p132
      %p134 = scmp.ne.s32.totalorder %s126, %s128
      %p135 = scmp.eq.s32.totalorder %s29, 1
      %p136 = por %p134, %p135
      %p137 = scmp.ne.s32.totalorder %s128, %s129
      %p138 = scmp.eq.s32.totalorder %s29, 0
      %p139 = por %p137, %p138
      %p140 = scmp.ne.s32.totalorder %s128, %s129
      %p141 = scmp.eq.s32.totalorder %s30, 1
      %p142 = por %p140, %p141
      %p144 = scmp.ne.s32.totalorder %s129, %s143
      %p145 = scmp.eq.s32.totalorder %s30, 0
      %p146 = por %p144, %p145
      %s148 = sadd.s32 %s147, 1
      %p151 = scmp.eq.s32.totalorder %s24, 1
      %p152 = scmp.ne.s32.totalorder %s147, %s149
      %p153 = scmp.eq.s32.totalorder %s24, 0
      %p154 = por %p152, %p153
      %p155 = scmp.ne.s32.totalorder %s147, %s149
      %p156 = scmp.eq.s32.totalorder %s29, 1
      %p157 = por %p155, %p156
      %p158 = scmp.ne.s32.totalorder %s149, %s150
      %p159 = scmp.eq.s32.totalorder %s29, 0
      %p160 = por %p158, %p159
      %p161 = scmp.ne.s32.totalorder %s149, %s150
      %p162 = scmp.eq.s32.totalorder %s30, 1
      %p163 = por %p161, %p162
      %p165 = scmp.ne.s32.totalorder %s150, %s164
      %p166 = scmp.eq.s32.totalorder %s30, 0
      %p167 = por %p165, %p166
      %s169 = sadd.s32 %s168, 1
      %p172 = scmp.eq.s32.totalorder %s24, 1
      %p173 = scmp.ne.s32.totalorder %s168, %s170
      %p174 = scmp.eq.s32.totalorder %s24, 0
      %p175 = por %p173, %p174
      %p176 = scmp.ne.s32.totalorder %s168, %s170
      %p177 = scmp.eq.s32.totalorder %s29, 1
      %p178 = por %p176, %p177
      %p179 = scmp.ne.s32.totalorder %s170, %s171
      %p180 = scmp.eq.s32.totalorder %s29, 0
      %p181 = por %p179, %p180
      %p182 = scmp.ne.s32.totalorder %s170, %s171
      %p183 = scmp.eq.s32.totalorder %s30, 1
      %p184 = por %p182, %p183
      %p186 = scmp.ne.s32.totalorder %s171, %s185
      %p187 = scmp.eq.s32.totalorder %s30, 0
      %p188 = por %p186, %p187
      %s190 = sadd.s32 %s189, 1
      %p193 = scmp.eq.s32.totalorder %s24, 1
      %p194 = scmp.ne.s32.totalorder %s189, %s191
      %p195 = scmp.eq.s32.totalorder %s24, 0
      %p196 = por %p194, %p195
      %p197 = scmp.ne.s32.totalorder %s189, %s191
      %p198 = scmp.eq.s32.totalorder %s29, 1
      %p199 = por %p197, %p198
      %p200 = scmp.ne.s32.totalorder %s191, %s192
      %p201 = scmp.eq.s32.totalorder %s29, 0
      %p202 = por %p200, %p201
      %p203 = scmp.ne.s32.totalorder %s191, %s192
      %p204 = scmp.eq.s32.totalorder %s30, 1
      %p205 = por %p203, %p204
      %p207 = scmp.ne.s32.totalorder %s192, %s206
      %p208 = scmp.eq.s32.totalorder %s30, 0
      %p209 = por %p207, %p208
      %s210 = ssub.s32 %s24, %s31
      %p211 = scmp.eq.s32.totalorder %s210, 0
      %s213 = sadd.s32 %s212, 1
      %s214 = scalar_select %p211, %s212, %s213
      %p217 = pneg %p211
      %p218 = scmp.eq.s32.totalorder %s24, 1
      %p219 = por %p217, %p218
      %p220 = scmp.ne.s32.totalorder %s212, %s215
      %p221 = scmp.eq.s32.totalorder %s24, 0
      %p222 = por %p220, %p221
      %p223 = scmp.ne.s32.totalorder %s212, %s215
      %p224 = scmp.eq.s32.totalorder %s29, 1
      %p225 = por %p223, %p224
      %p226 = scmp.ne.s32.totalorder %s215, %s216
      %p227 = scmp.eq.s32.totalorder %s29, 0
      %p228 = por %p226, %p227
      %p229 = scmp.ne.s32.totalorder %s215, %s216
      %p230 = scmp.eq.s32.totalorder %s30, 1
      %p231 = por %p229, %p230
      %p233 = scmp.ne.s32.totalorder %s216, %s232
      %p234 = scmp.eq.s32.totalorder %s30, 0
      %p235 = por %p233, %p234
      %p236 = scmp.le.s32.totalorder 1, %s24
      %p237 = scmp.lt.s32.totalorder %s24, 3
      %p238 = pnand %p236, %p237
      %p239 = pneg %p238
      // Predicated region
      $region9: #{tpu_custom_call.1} parent=5 // pred_check
        _
      $region10: #{tpu_custom_call.1} parent=5 // pred_check_branch
        %241 = sbr.rel (%p238) target = $region12
      $region11: #{tpu_custom_call.1} parent=5 // pred_region
        %s242 = ssub.s32 %s24, 1
        // Predicated region
        $region13: #{tpu_custom_call.1} parent=11 // pred_check
          %p243 = pneg %p97
        $region14: #{tpu_custom_call.1} parent=11 // pred_check_branch
          %245 = sbr.rel (%p243) target = $region16
        $region15: #{tpu_custom_call.1} parent=11 // pred_region
          %s247 = ssub.s32 4096, 4096
          %248 = vsyncadd [#allocation6], %s247
          %s249 = sshll.u32 [#allocation7], 4
          %s250 = int_to_ptr.vmem [resolvable:$true] %s249
          %255 = dma.hbm_to_vmem [thread:$0]  %s2, 4096, %s250, [#allocation6], 128, 128, 8
        $region16: #{tpu_custom_call.1} parent=11 // pred_fallthru
          _
        // Predicated region
        $region17: #{tpu_custom_call.1} parent=11 // pred_check
          %p256 = pneg %p118
        $region18: #{tpu_custom_call.1} parent=11 // pred_check_branch
          %258 = sbr.rel (%p256) target = $region20
        $region19: #{tpu_custom_call.1} parent=11 // pred_region
          _
        $region20: #{tpu_custom_call.1} parent=11 // pred_fallthru
          _
        // Predicated region
        $region21: #{tpu_custom_call.1} parent=11 // pred_check
          %p259 = pneg %p139
        $region22: #{tpu_custom_call.1} parent=11 // pred_check_branch
          %261 = sbr.rel (%p259) target = $region24
        $region23: #{tpu_custom_call.1} parent=11 // pred_region
          %s263 = ssub.s32 8192, 8192
          %264 = vsyncadd [#allocation9], %s263
          %s265 = sshll.u32 [#allocation8], 4
          %s266 = int_to_ptr.vmem [resolvable:$true] %s265
          %271 = dma.hbm_to_vmem [thread:$0]  %s4, 8192, %s266, [#allocation9], 128, 128, 8
        $region24: #{tpu_custom_call.1} parent=11 // pred_fallthru
          _
        // Predicated region
        $region25: #{tpu_custom_call.1} parent=11 // pred_check
          %p272 = pneg %p160
        $region26: #{tpu_custom_call.1} parent=11 // pred_check_branch
          %274 = sbr.rel (%p272) target = $region28
        $region27: #{tpu_custom_call.1} parent=11 // pred_region
          _
        $region28: #{tpu_custom_call.1} parent=11 // pred_fallthru
          _
        // Predicated region
        $region29: #{tpu_custom_call.1} parent=11 // pred_check
          %p275 = pneg %p181
        $region30: #{tpu_custom_call.1} parent=11 // pred_check_branch
          %277 = sbr.rel (%p275) target = $region32
        $region31: #{tpu_custom_call.1} parent=11 // pred_region
          %s279 = ssub.s32 2048, 2048
          %280 = vsyncadd [#allocation9], %s279
          %s281 = sshll.u32 [#allocation10], 4
          %s282 = int_to_ptr.vmem [resolvable:$true] %s281
          %287 = dma.hbm_to_vmem [thread:$0]  %s6, 2048, %s282, [#allocation9], 128, 128, 8
        $region32: #{tpu_custom_call.1} parent=11 // pred_fallthru
          _
        // Predicated region
        $region33: #{tpu_custom_call.1} parent=11 // pred_check
          %p288 = pneg %p202
        $region34: #{tpu_custom_call.1} parent=11 // pred_check_branch
          %290 = sbr.rel (%p288) target = $region36
        $region35: #{tpu_custom_call.1} parent=11 // pred_region
          _
        $region36: #{tpu_custom_call.1} parent=11 // pred_fallthru
          _
      $region12: #{tpu_custom_call.1} parent=5 // pred_fallthru
        _
      %p291 = scmp.lt.s32.totalorder %s24, 2
      // Predicated region
      $region37: #{tpu_custom_call.1} parent=5 // pred_check
        %p292 = pneg %p291
      $region38: #{tpu_custom_call.1} parent=5 // pred_check_branch
        %294 = sbr.rel (%p292) target = $region40
      $region39: #{tpu_custom_call.1} parent=5 // pred_region
        // Predicated region
        $region41: #{tpu_custom_call.1} parent=39 // pred_check
          %p295 = pneg %p44
        $region42: #{tpu_custom_call.1} parent=39 // pred_check_branch
          %297 = sbr.rel (%p295) target = $region44
        $region43: #{tpu_custom_call.1} parent=39 // pred_region
          %s298 = sand.u32 %s34, 1
          %s299 = scalar_lea.sflag [#allocation3], %s298
          %s300 = sand.u32 %s34, 1
          %s301 = smul.addr %s300, 8
          %s302 = scalar_lea.vmem [#allocation2], %s301
          %s304 = ssub.s32 128, 128
          %305 = vsyncadd %s299, %s304
          %s306 = smul.addr %s24, 128
          %s307 = scalar_lea.hbm %s0, %s306
          %s309 = sshll.u32 %s302, 4
          %s310 = int_to_ptr.vmem [resolvable:$true] %s309
          %312 = dma.hbm_to_vmem [thread:$0]  %s307, 128, %s310, %s299
        $region44: #{tpu_custom_call.1} parent=39 // pred_fallthru
          _
        // Predicated region
        $region45: #{tpu_custom_call.1} parent=39 // pred_check
          %p313 = pneg %p70
        $region46: #{tpu_custom_call.1} parent=39 // pred_check_branch
          %315 = sbr.rel (%p313) target = $region48
        $region47: #{tpu_custom_call.1} parent=39 // pred_region
          %s316 = sand.u32 %s24, 1
          %s317 = scalar_lea.sflag [#allocation6], %s316
          %s318 = sand.u32 %s60, 1
          %s319 = smul.addr %s318, 8
          %s320 = scalar_lea.vmem [#allocation5], %s319
          %s322 = ssub.s32 128, 128
          %323 = vsyncadd %s317, %s322
          %s324 = smul.addr %s24, 128
          %s325 = scalar_lea.hbm %s1, %s324
          %s327 = sshll.u32 %s320, 4
          %s328 = int_to_ptr.vmem [resolvable:$true] %s327
          %330 = dma.hbm_to_vmem [thread:$0]  %s325, 128, %s328, %s317
        $region48: #{tpu_custom_call.1} parent=39 // pred_fallthru
          _
      $region40: #{tpu_custom_call.1} parent=5 // pred_fallthru
        _
      %p331 = scmp.le.s32.totalorder 1, %s24
      %p332 = scmp.lt.s32.totalorder %s24, 3
      %p333 = pnand %p331, %p332
      %p334 = pneg %p333
      // Predicated region
      $region49: #{tpu_custom_call.1} parent=5 // pred_check
        _
      $region50: #{tpu_custom_call.1} parent=5 // pred_check_branch
        %336 = sbr.rel (%p333) target = $region52
      $region51: #{tpu_custom_call.1} parent=5 // pred_region
        %s337 = ssub.s32 %s24, 1
        %s338 = sand.u32 %s37, 1
        %s339 = scalar_lea.sflag [#allocation3], %s338
        %s340 = sand.u32 %s37, 1
        %s341 = smul.addr %s340, 8
        %s342 = scalar_lea.vmem [#allocation2], %s341
        // Predicated region
        $region53: #{tpu_custom_call.1} parent=51 // pred_check
          %p343 = pneg %p50
        $region54: #{tpu_custom_call.1} parent=51 // pred_check_branch
          %345 = sbr.rel (%p343) target = $region56
        $region55: #{tpu_custom_call.1} parent=51 // pred_region
          %346 = dma.done %s339, 128
        $region56: #{tpu_custom_call.1} parent=51 // pred_fallthru
          _
        %s347 = sand.u32 %s29, 1
        %s348 = scalar_lea.sflag [#allocation6], %s347
        %s349 = sand.u32 %s63, 1
        %s350 = smul.addr %s349, 8
        %s351 = scalar_lea.vmem [#allocation5], %s350
        // Predicated region
        $region57: #{tpu_custom_call.1} parent=51 // pred_check
          %p352 = pneg %p76
        $region58: #{tpu_custom_call.1} parent=51 // pred_check_branch
          %354 = sbr.rel (%p352) target = $region60
        $region59: #{tpu_custom_call.1} parent=51 // pred_region
          %355 = dma.done %s348, 128
        $region60: #{tpu_custom_call.1} parent=51 // pred_fallthru
          _
        // Predicated region
        $region61: #{tpu_custom_call.1} parent=51 // pred_check
          %p356 = pneg %p97
        $region62: #{tpu_custom_call.1} parent=51 // pred_check_branch
          %358 = sbr.rel (%p356) target = $region64
        $region63: #{tpu_custom_call.1} parent=51 // pred_region
          %359 = dma.done [#allocation6], 4096
        $region64: #{tpu_custom_call.1} parent=51 // pred_fallthru
          _
        // Predicated region
        $region65: #{tpu_custom_call.1} parent=51 // pred_check
          %p360 = pneg %p139
        $region66: #{tpu_custom_call.1} parent=51 // pred_check_branch
          %362 = sbr.rel (%p360) target = $region68
        $region67: #{tpu_custom_call.1} parent=51 // pred_region
          %363 = dma.done [#allocation9], 8192
        $region68: #{tpu_custom_call.1} parent=51 // pred_fallthru
          _
        // Predicated region
        $region69: #{tpu_custom_call.1} parent=51 // pred_check
          %p364 = pneg %p181
        $region70: #{tpu_custom_call.1} parent=51 // pred_check_branch
          %366 = sbr.rel (%p364) target = $region72
        $region71: #{tpu_custom_call.1} parent=51 // pred_region
          %367 = dma.done [#allocation9], 2048
        $region72: #{tpu_custom_call.1} parent=51 // pred_fallthru
          _
        %s368 = sand.u32 %s37, 1
        %s369 = scalar_lea.sflag [#allocation3], %s368
        %s370 = sand.u32 %s37, 1
        %s371 = smul.addr %s370, 8
        %s372 = scalar_lea.vmem [#allocation2], %s371
        %p373 = pneg %p50
        %p374 = pneg %p47
        %s375 = sand.u32 %s29, 1
        %s376 = scalar_lea.sflag [#allocation6], %s375
        %s377 = sand.u32 %s63, 1
        %s378 = smul.addr %s377, 8
        %s379 = scalar_lea.vmem [#allocation5], %s378
        %p380 = pneg %p76
        %p381 = pneg %p73
        %p382 = pneg %p97
        %p383 = pneg %p94
        %p384 = pneg %p118
        %p385 = pneg %p115
        %p386 = pneg %p139
        %p387 = pneg %p136
        %p388 = pneg %p160
        %p389 = pneg %p157
        %p390 = pneg %p181
        %p391 = pneg %p178
        %p392 = pneg %p202
        %p393 = pneg %p199
        %p394 = pneg %p228
        %p395 = pneg %p225
        %s396 = sand.u32 %s215, 1
        %s397 = scalar_lea.sflag [#allocation4], %s396
        %s398 = sand.u32 %s215, 1
        %s399 = smul.addr %s398, 8
        %s400 = scalar_lea.vmem [#allocation11], %s399
        %v401 = vld [vmem:[%s342] sm:$0xff]
        %v402 = vmax.f32 %v401, 0.0
        %v403 = vld [vmem:[%s351] sm:$0xff]
        %v404 = vmax.f32 %v403, 0.0
        %v405 = vld [vmem:[#allocation7] sm:$0xff]
        %v406 = vld [vmem:[#allocation7 + $0x8] sm:$0xff]
        %v407 = vld [vmem:[#allocation7 + $0x10] sm:$0xff]
        %v408 = vld [vmem:[#allocation7 + $0x18] sm:$0xff]
        %v409 = vld [vmem:[#allocation7 + $0x20] sm:$0xff]
        %v410 = vld [vmem:[#allocation7 + $0x28] sm:$0xff]
        %v411 = vld [vmem:[#allocation7 + $0x30] sm:$0xff]
        %v412 = vld [vmem:[#allocation7 + $0x38] sm:$0xff]
        %v413 = vld [vmem:[#allocation7 + $0x40] sm:$0xff]
        %v414 = vld [vmem:[#allocation7 + $0x48] sm:$0xff]
        %v415 = vld [vmem:[#allocation7 + $0x50] sm:$0xff]
        %v416 = vld [vmem:[#allocation7 + $0x58] sm:$0xff]
        %v417 = vld [vmem:[#allocation7 + $0x60] sm:$0xff]
        %v418 = vld [vmem:[#allocation7 + $0x68] sm:$0xff]
        %v419 = vld [vmem:[#allocation7 + $0x70] sm:$0xff]
        %v420 = vld [vmem:[#allocation7 + $0x78] sm:$0xff]
        %s421 = scalar_lea.vmem [#allocation7], 128
        %v422 = vld [vmem:[%s421] sm:$0xff]
        %v423 = vld [vmem:[%s421 + $0x8] sm:$0xff]
        %v424 = vld [vmem:[%s421 + $0x10] sm:$0xff]
        %v425 = vld [vmem:[%s421 + $0x18] sm:$0xff]
        %v426 = vld [vmem:[%s421 + $0x20] sm:$0xff]
        %v427 = vld [vmem:[%s421 + $0x28] sm:$0xff]
        %v428 = vld [vmem:[%s421 + $0x30] sm:$0xff]
        %v429 = vld [vmem:[%s421 + $0x38] sm:$0xff]
        %v430 = vld [vmem:[%s421 + $0x40] sm:$0xff]
        %v431 = vld [vmem:[%s421 + $0x48] sm:$0xff]
        %v432 = vld [vmem:[%s421 + $0x50] sm:$0xff]
        %v433 = vld [vmem:[%s421 + $0x58] sm:$0xff]
        %v434 = vld [vmem:[%s421 + $0x60] sm:$0xff]
        %v435 = vld [vmem:[%s421 + $0x68] sm:$0xff]
        %v436 = vld [vmem:[%s421 + $0x70] sm:$0xff]
        %v437 = vld [vmem:[%s421 + $0x78] sm:$0xff]
        %438 = vmatprep.subr.mxu0 0.0
        %439 = vmatpush1.msra.mxu0 %v422
        %440 = vmatprep.subr.mxu0 0.0
        %441 = vmatpush1.msra.mxu0 %v423
        %442 = vmatprep.subr.mxu0 0.0
        %443 = vmatpush1.msra.mxu0 %v424
        %444 = vmatprep.subr.mxu0 0.0
        %445 = vmatpush1.msra.mxu0 %v425
        %446 = vmatprep.subr.mxu0 0.0
        %447 = vmatpush1.msra.mxu0 %v426
        %448 = vmatprep.subr.mxu0 0.0
        %449 = vmatpush1.msra.mxu0 %v427
        %450 = vmatprep.subr.mxu0 0.0
        %451 = vmatpush1.msra.mxu0 %v428
        %452 = vmatprep.subr.mxu0 0.0
        %453 = vmatpush1.msra.mxu0 %v429
        %454 = vmatprep.subr.mxu0 0.0
        %455 = vmatpush1.msra.mxu0 %v430
        %456 = vmatprep.subr.mxu0 0.0
        %457 = vmatpush1.msra.mxu0 %v431
        %458 = vmatprep.subr.mxu0 0.0
        %459 = vmatpush1.msra.mxu0 %v432
        %460 = vmatprep.subr.mxu0 0.0
        %461 = vmatpush1.msra.mxu0 %v433
        %462 = vmatprep.subr.mxu0 0.0
        %463 = vmatpush1.msra.mxu0 %v434
        %464 = vmatprep.subr.mxu0 0.0
        %465 = vmatpush1.msra.mxu0 %v435
        %466 = vmatprep.subr.mxu0 0.0
        %467 = vmatpush1.msra.mxu0 %v436
        %468 = vmatprep.subr.mxu0 0.0
        %469 = vmatpush1.msra.mxu0 %v437
        %470 = vmatprep.subr.mxu0 0.0
        %471 = vmatpush1.msra.mxu0 0.0
        %472 = vmatprep.subr.mxu0 0.0
        %473 = vmatpush1.msra.mxu0 0.0
        %474 = vmatprep.subr.mxu0 0.0
        %475 = vmatpush1.msra.mxu0 0.0
        %476 = vmatprep.subr.mxu0 0.0
        %477 = vmatpush1.msra.mxu0 0.0
        %478 = vmatprep.subr.mxu0 0.0
        %479 = vmatpush1.msra.mxu0 0.0
        %480 = vmatprep.subr.mxu0 0.0
        %481 = vmatpush1.msra.mxu0 0.0
        %482 = vmatprep.subr.mxu0 0.0
        %483 = vmatpush1.msra.mxu0 0.0
        %484 = vmatprep.subr.mxu0 0.0
        %485 = vmatpush1.msra.mxu0 0.0
        %486 = vmatprep.subr.mxu0 0.0
        %487 = vmatpush1.msra.mxu0 0.0
        %488 = vmatprep.subr.mxu0 0.0
        %489 = vmatpush1.msra.mxu0 0.0
        %490 = vmatprep.subr.mxu0 0.0
        %491 = vmatpush1.msra.mxu0 0.0
        %492 = vmatprep.subr.mxu0 0.0
        %493 = vmatpush1.msra.mxu0 0.0
        %494 = vmatprep.subr.mxu0 0.0
        %495 = vmatpush1.msra.mxu0 0.0
        %496 = vmatprep.subr.mxu0 0.0
        %497 = vmatpush1.msra.mxu0 0.0
        %498 = vmatprep.subr.mxu0 0.0
        %499 = vmatpush1.msra.mxu0 0.0
        %500 = vmatprep.subr.mxu0 0.0
        %501 = vmatpush1.msra.mxu0 0.0
        %502 = vmatprep.mubr.f32.mxu0 0.0
        %503 = vmatmul.mubr.f32.gmra.mrb[0].mxu0 %v404
        %v504 = vpop.f32.mrb[0].mxu0
        %v505 = vadd.f32 0.0, %v504
        %v506 = vpop.f32.mrb[0].mxu0
        %507 = vdwg.mxu0
        %508 = vmatprep.subr.mxu0 0.0
        %509 = vmatpush1.msra.mxu0 %v405
        %510 = vmatprep.subr.mxu0 0.0
        %511 = vmatpush1.msra.mxu0 %v406
        %512 = vmatprep.subr.mxu0 0.0
        %513 = vmatpush1.msra.mxu0 %v407
        %514 = vmatprep.subr.mxu0 0.0
        %515 = vmatpush1.msra.mxu0 %v408
        %516 = vmatprep.subr.mxu0 0.0
        %517 = vmatpush1.msra.mxu0 %v409
        %518 = vmatprep.subr.mxu0 0.0
        %519 = vmatpush1.msra.mxu0 %v410
        %520 = vmatprep.subr.mxu0 0.0
        %521 = vmatpush1.msra.mxu0 %v411
        %522 = vmatprep.subr.mxu0 0.0
        %523 = vmatpush1.msra.mxu0 %v412
        %524 = vmatprep.subr.mxu0 0.0
        %525 = vmatpush1.msra.mxu0 %v413
        %526 = vmatprep.subr.mxu0 0.0
        %527 = vmatpush1.msra.mxu0 %v414
        %528 = vmatprep.subr.mxu0 0.0
        %529 = vmatpush1.msra.mxu0 %v415
        %530 = vmatprep.subr.mxu0 0.0
        %531 = vmatpush1.msra.mxu0 %v416
        %532 = vmatprep.subr.mxu0 0.0
        %533 = vmatpush1.msra.mxu0 %v417
        %534 = vmatprep.subr.mxu0 0.0
        %535 = vmatpush1.msra.mxu0 %v418
        %536 = vmatprep.subr.mxu0 0.0
        %537 = vmatpush1.msra.mxu0 %v419
        %538 = vmatprep.subr.mxu0 0.0
        %539 = vmatpush1.msra.mxu0 %v420
        %540 = vmatprep.subr.mxu0 0.0
        %541 = vmatpush1.msra.mxu0 0.0
        %542 = vmatprep.subr.mxu0 0.0
        %543 = vmatpush1.msra.mxu0 0.0
        %544 = vmatprep.subr.mxu0 0.0
        %545 = vmatpush1.msra.mxu0 0.0
        %546 = vmatprep.subr.mxu0 0.0
        %547 = vmatpush1.msra.mxu0 0.0
        %548 = vmatprep.subr.mxu0 0.0
        %549 = vmatpush1.msra.mxu0 0.0
        %550 = vmatprep.subr.mxu0 0.0
        %551 = vmatpush1.msra.mxu0 0.0
        %552 = vmatprep.subr.mxu0 0.0
        %553 = vmatpush1.msra.mxu0 0.0
        %554 = vmatprep.subr.mxu0 0.0
        %555 = vmatpush1.msra.mxu0 0.0
        %556 = vmatprep.subr.mxu0 0.0
        %557 = vmatpush1.msra.mxu0 0.0
        %558 = vmatprep.subr.mxu0 0.0
        %559 = vmatpush1.msra.mxu0 0.0
        %560 = vmatprep.subr.mxu0 0.0
        %561 = vmatpush1.msra.mxu0 0.0
        %562 = vmatprep.subr.mxu0 0.0
        %563 = vmatpush1.msra.mxu0 0.0
        %564 = vmatprep.subr.mxu0 0.0
        %565 = vmatpush1.msra.mxu0 0.0
        %566 = vmatprep.subr.mxu0 0.0
        %567 = vmatpush1.msra.mxu0 0.0
        %568 = vmatprep.subr.mxu0 0.0
        %569 = vmatpush1.msra.mxu0 0.0
        %570 = vmatprep.subr.mxu0 0.0
        %571 = vmatpush1.msra.mxu0 0.0
        %572 = vmatprep.mubr.f32.mxu0 0.0
        %573 = vmatmul.mubr.f32.gmra.mrb[0].mxu0 %v402
        %v574 = vpop.f32.mrb[0].mxu0
        %v575 = vadd.f32 %v505, %v574
        %v576 = vpop.f32.mrb[0].mxu0
        %577 = vdwg.mxu0
        %v578 = vld [vmem:[%s3] sm:$0x1]
        %v580 = vlaneseq
        %v581 = vshrl.u32 %v580, 7
        %v582 = vsub.s32 0, %v581
        %v583 = vrot.slane %v578, %v582
        %v585 = vadd.f32 %v575, %v583
        %v586 = vmax.f32 %v585, 0.0
        %v587 = vld [vmem:[#allocation8] sm:$0xff]
        %v588 = vld [vmem:[#allocation8 + $0x8] sm:$0xff]
        %v589 = vld [vmem:[#allocation8 + $0x10] sm:$0xff]
        %v590 = vld [vmem:[#allocation8 + $0x18] sm:$0xff]
        %v591 = vld [vmem:[#allocation8 + $0x20] sm:$0xff]
        %v592 = vld [vmem:[#allocation8 + $0x28] sm:$0xff]
        %v593 = vld [vmem:[#allocation8 + $0x30] sm:$0xff]
        %v594 = vld [vmem:[#allocation8 + $0x38] sm:$0xff]
        %v595 = vld [vmem:[#allocation8 + $0x40] sm:$0xff]
        %v596 = vld [vmem:[#allocation8 + $0x48] sm:$0xff]
        %v597 = vld [vmem:[#allocation8 + $0x50] sm:$0xff]
        %v598 = vld [vmem:[#allocation8 + $0x58] sm:$0xff]
        %v599 = vld [vmem:[#allocation8 + $0x60] sm:$0xff]
        %v600 = vld [vmem:[#allocation8 + $0x68] sm:$0xff]
        %v601 = vld [vmem:[#allocation8 + $0x70] sm:$0xff]
        %v602 = vld [vmem:[#allocation8 + $0x78] sm:$0xff]
        %v603 = vld [vmem:[%s5] sm:$0x1]
        %v605 = vlaneseq
        %v606 = vshrl.u32 %v605, 7
        %v607 = vsub.s32 0, %v606
        %v608 = vrot.slane %v603, %v607
        %610 = vmatprep.subr.mxu0 0.0
        %611 = vmatpush1.msra.mxu0 %v587
        %612 = vmatprep.subr.mxu0 0.0
        %613 = vmatpush1.msra.mxu0 %v588
        %614 = vmatprep.subr.mxu0 0.0
        %615 = vmatpush1.msra.mxu0 %v589
        %616 = vmatprep.subr.mxu0 0.0
        %617 = vmatpush1.msra.mxu0 %v590
        %618 = vmatprep.subr.mxu0 0.0
        %619 = vmatpush1.msra.mxu0 %v591
        %620 = vmatprep.subr.mxu0 0.0
        %621 = vmatpush1.msra.mxu0 %v592
        %622 = vmatprep.subr.mxu0 0.0
        %623 = vmatpush1.msra.mxu0 %v593
        %624 = vmatprep.subr.mxu0 0.0
        %625 = vmatpush1.msra.mxu0 %v594
        %626 = vmatprep.subr.mxu0 0.0
        %627 = vmatpush1.msra.mxu0 %v595
        %628 = vmatprep.subr.mxu0 0.0
        %629 = vmatpush1.msra.mxu0 %v596
        %630 = vmatprep.subr.mxu0 0.0
        %631 = vmatpush1.msra.mxu0 %v597
        %632 = vmatprep.subr.mxu0 0.0
        %633 = vmatpush1.msra.mxu0 %v598
        %634 = vmatprep.subr.mxu0 0.0
        %635 = vmatpush1.msra.mxu0 %v599
        %636 = vmatprep.subr.mxu0 0.0
        %637 = vmatpush1.msra.mxu0 %v600
        %638 = vmatprep.subr.mxu0 0.0
        %639 = vmatpush1.msra.mxu0 %v601
        %640 = vmatprep.subr.mxu0 0.0
        %641 = vmatpush1.msra.mxu0 %v602
        %642 = vmatprep.subr.mxu0 0.0
        %643 = vmatpush1.msra.mxu0 0.0
        %644 = vmatprep.subr.mxu0 0.0
        %645 = vmatpush1.msra.mxu0 0.0
        %646 = vmatprep.subr.mxu0 0.0
        %647 = vmatpush1.msra.mxu0 0.0
        %648 = vmatprep.subr.mxu0 0.0
        %649 = vmatpush1.msra.mxu0 0.0
        %650 = vmatprep.subr.mxu0 0.0
        %651 = vmatpush1.msra.mxu0 0.0
        %652 = vmatprep.subr.mxu0 0.0
        %653 = vmatpush1.msra.mxu0 0.0
        %654 = vmatprep.subr.mxu0 0.0
        %655 = vmatpush1.msra.mxu0 0.0
        %656 = vmatprep.subr.mxu0 0.0
        %657 = vmatpush1.msra.mxu0 0.0
        %658 = vmatprep.subr.mxu0 0.0
        %659 = vmatpush1.msra.mxu0 0.0
        %660 = vmatprep.subr.mxu0 0.0
        %661 = vmatpush1.msra.mxu0 0.0
        %662 = vmatprep.subr.mxu0 0.0
        %663 = vmatpush1.msra.mxu0 0.0
        %664 = vmatprep.subr.mxu0 0.0
        %665 = vmatpush1.msra.mxu0 0.0
        %666 = vmatprep.subr.mxu0 0.0
        %667 = vmatpush1.msra.mxu0 0.0
        %668 = vmatprep.subr.mxu0 0.0
        %669 = vmatpush1.msra.mxu0 0.0
        %670 = vmatprep.subr.mxu0 0.0
        %671 = vmatpush1.msra.mxu0 0.0
        %672 = vmatprep.subr.mxu0 0.0
        %673 = vmatpush1.msra.mxu0 0.0
        %674 = vmatprep.mubr.f32.mxu0 0.0
        %675 = vmatmul.mubr.f32.gmra.mrb[0].mxu0 %v586
        %v676 = vpop.f32.mrb[0].mxu0
        %v677 = vadd.f32 %v608, %v676
        %v678 = vpop.f32.mrb[0].mxu0
        %679 = vdwg.mxu0
        %v680 = vmax.f32 %v677, 0.0
        %s681 = scalar_lea.vmem [#allocation8], 128
        %v682 = vld [vmem:[%s681] sm:$0xff]
        %v683 = vld [vmem:[%s681 + $0x8] sm:$0xff]
        %v684 = vld [vmem:[%s681 + $0x10] sm:$0xff]
        %v685 = vld [vmem:[%s681 + $0x18] sm:$0xff]
        %v686 = vld [vmem:[%s681 + $0x20] sm:$0xff]
        %v687 = vld [vmem:[%s681 + $0x28] sm:$0xff]
        %v688 = vld [vmem:[%s681 + $0x30] sm:$0xff]
        %v689 = vld [vmem:[%s681 + $0x38] sm:$0xff]
        %v690 = vld [vmem:[%s681 + $0x40] sm:$0xff]
        %v691 = vld [vmem:[%s681 + $0x48] sm:$0xff]
        %v692 = vld [vmem:[%s681 + $0x50] sm:$0xff]
        %v693 = vld [vmem:[%s681 + $0x58] sm:$0xff]
        %v694 = vld [vmem:[%s681 + $0x60] sm:$0xff]
        %v695 = vld [vmem:[%s681 + $0x68] sm:$0xff]
        %v696 = vld [vmem:[%s681 + $0x70] sm:$0xff]
        %v697 = vld [vmem:[%s681 + $0x78] sm:$0xff]
        %s698 = scalar_lea.vmem %s5, 1
        %v699 = vld [vmem:[%s698] sm:$0x1]
        %v701 = vlaneseq
        %v702 = vshrl.u32 %v701, 7
        %v703 = vsub.s32 0, %v702
        %v704 = vrot.slane %v699, %v703
        %706 = vmatprep.subr.mxu0 0.0
        %707 = vmatpush1.msra.mxu0 %v682
        %708 = vmatprep.subr.mxu0 0.0
        %709 = vmatpush1.msra.mxu0 %v683
        %710 = vmatprep.subr.mxu0 0.0
        %711 = vmatpush1.msra.mxu0 %v684
        %712 = vmatprep.subr.mxu0 0.0
        %713 = vmatpush1.msra.mxu0 %v685
        %714 = vmatprep.subr.mxu0 0.0
        %715 = vmatpush1.msra.mxu0 %v686
        %716 = vmatprep.subr.mxu0 0.0
        %717 = vmatpush1.msra.mxu0 %v687
        %718 = vmatprep.subr.mxu0 0.0
        %719 = vmatpush1.msra.mxu0 %v688
        %720 = vmatprep.subr.mxu0 0.0
        %721 = vmatpush1.msra.mxu0 %v689
        %722 = vmatprep.subr.mxu0 0.0
        %723 = vmatpush1.msra.mxu0 %v690
        %724 = vmatprep.subr.mxu0 0.0
        %725 = vmatpush1.msra.mxu0 %v691
        %726 = vmatprep.subr.mxu0 0.0
        %727 = vmatpush1.msra.mxu0 %v692
        %728 = vmatprep.subr.mxu0 0.0
        %729 = vmatpush1.msra.mxu0 %v693
        %730 = vmatprep.subr.mxu0 0.0
        %731 = vmatpush1.msra.mxu0 %v694
        %732 = vmatprep.subr.mxu0 0.0
        %733 = vmatpush1.msra.mxu0 %v695
        %734 = vmatprep.subr.mxu0 0.0
        %735 = vmatpush1.msra.mxu0 %v696
        %736 = vmatprep.subr.mxu0 0.0
        %737 = vmatpush1.msra.mxu0 %v697
        %738 = vmatprep.subr.mxu0 0.0
        %739 = vmatpush1.msra.mxu0 0.0
        %740 = vmatprep.subr.mxu0 0.0
        %741 = vmatpush1.msra.mxu0 0.0
        %742 = vmatprep.subr.mxu0 0.0
        %743 = vmatpush1.msra.mxu0 0.0
        %744 = vmatprep.subr.mxu0 0.0
        %745 = vmatpush1.msra.mxu0 0.0
        %746 = vmatprep.subr.mxu0 0.0
        %747 = vmatpush1.msra.mxu0 0.0
        %748 = vmatprep.subr.mxu0 0.0
        %749 = vmatpush1.msra.mxu0 0.0
        %750 = vmatprep.subr.mxu0 0.0
        %751 = vmatpush1.msra.mxu0 0.0
        %752 = vmatprep.subr.mxu0 0.0
        %753 = vmatpush1.msra.mxu0 0.0
        %754 = vmatprep.subr.mxu0 0.0
        %755 = vmatpush1.msra.mxu0 0.0
        %756 = vmatprep.subr.mxu0 0.0
        %757 = vmatpush1.msra.mxu0 0.0
        %758 = vmatprep.subr.mxu0 0.0
        %759 = vmatpush1.msra.mxu0 0.0
        %760 = vmatprep.subr.mxu0 0.0
        %761 = vmatpush1.msra.mxu0 0.0
        %762 = vmatprep.subr.mxu0 0.0
        %763 = vmatpush1.msra.mxu0 0.0
        %764 = vmatprep.subr.mxu0 0.0
        %765 = vmatpush1.msra.mxu0 0.0
        %766 = vmatprep.subr.mxu0 0.0
        %767 = vmatpush1.msra.mxu0 0.0
        %768 = vmatprep.subr.mxu0 0.0
        %769 = vmatpush1.msra.mxu0 0.0
        %770 = vmatprep.mubr.f32.mxu0 0.0
        %771 = vmatmul.mubr.f32.gmra.mrb[0].mxu0 %v680
        %v772 = vpop.f32.mrb[0].mxu0
        %v773 = vadd.f32 %v704, %v772
        %v774 = vpop.f32.mrb[0].mxu0
        %775 = vdwg.mxu0
        %v776 = vadd.f32 %v585, %v773
        %v777 = vmax.f32 %v776, 0.0
        %s778 = scalar_lea.vmem [#allocation8], 256
        %v779 = vld [vmem:[%s778] sm:$0xff]
        %v780 = vld [vmem:[%s778 + $0x8] sm:$0xff]
        %v781 = vld [vmem:[%s778 + $0x10] sm:$0xff]
        %v782 = vld [vmem:[%s778 + $0x18] sm:$0xff]
        %v783 = vld [vmem:[%s778 + $0x20] sm:$0xff]
        %v784 = vld [vmem:[%s778 + $0x28] sm:$0xff]
        %v785 = vld [vmem:[%s778 + $0x30] sm:$0xff]
        %v786 = vld [vmem:[%s778 + $0x38] sm:$0xff]
        %v787 = vld [vmem:[%s778 + $0x40] sm:$0xff]
        %v788 = vld [vmem:[%s778 + $0x48] sm:$0xff]
        %v789 = vld [vmem:[%s778 + $0x50] sm:$0xff]
        %v790 = vld [vmem:[%s778 + $0x58] sm:$0xff]
        %v791 = vld [vmem:[%s778 + $0x60] sm:$0xff]
        %v792 = vld [vmem:[%s778 + $0x68] sm:$0xff]
        %v793 = vld [vmem:[%s778 + $0x70] sm:$0xff]
        %v794 = vld [vmem:[%s778 + $0x78] sm:$0xff]
        %s795 = scalar_lea.vmem %s5, 2
        %v796 = vld [vmem:[%s795] sm:$0x1]
        %v798 = vlaneseq
        %v799 = vshrl.u32 %v798, 7
        %v800 = vsub.s32 0, %v799
        %v801 = vrot.slane %v796, %v800
        %803 = vmatprep.subr.mxu0 0.0
        %804 = vmatpush1.msra.mxu0 %v779
        %805 = vmatprep.subr.mxu0 0.0
        %806 = vmatpush1.msra.mxu0 %v780
        %807 = vmatprep.subr.mxu0 0.0
        %808 = vmatpush1.msra.mxu0 %v781
        %809 = vmatprep.subr.mxu0 0.0
        %810 = vmatpush1.msra.mxu0 %v782
        %811 = vmatprep.subr.mxu0 0.0
        %812 = vmatpush1.msra.mxu0 %v783
        %813 = vmatprep.subr.mxu0 0.0
        %814 = vmatpush1.msra.mxu0 %v784
        %815 = vmatprep.subr.mxu0 0.0
        %816 = vmatpush1.msra.mxu0 %v785
        %817 = vmatprep.subr.mxu0 0.0
        %818 = vmatpush1.msra.mxu0 %v786
        %819 = vmatprep.subr.mxu0 0.0
        %820 = vmatpush1.msra.mxu0 %v787
        %821 = vmatprep.subr.mxu0 0.0
        %822 = vmatpush1.msra.mxu0 %v788
        %823 = vmatprep.subr.mxu0 0.0
        %824 = vmatpush1.msra.mxu0 %v789
        %825 = vmatprep.subr.mxu0 0.0
        %826 = vmatpush1.msra.mxu0 %v790
        %827 = vmatprep.subr.mxu0 0.0
        %828 = vmatpush1.msra.mxu0 %v791
        %829 = vmatprep.subr.mxu0 0.0
        %830 = vmatpush1.msra.mxu0 %v792
        %831 = vmatprep.subr.mxu0 0.0
        %832 = vmatpush1.msra.mxu0 %v793
        %833 = vmatprep.subr.mxu0 0.0
        %834 = vmatpush1.msra.mxu0 %v794
        %835 = vmatprep.subr.mxu0 0.0
        %836 = vmatpush1.msra.mxu0 0.0
        %837 = vmatprep.subr.mxu0 0.0
        %838 = vmatpush1.msra.mxu0 0.0
        %839 = vmatprep.subr.mxu0 0.0
        %840 = vmatpush1.msra.mxu0 0.0
        %841 = vmatprep.subr.mxu0 0.0
        %842 = vmatpush1.msra.mxu0 0.0
        %843 = vmatprep.subr.mxu0 0.0
        %844 = vmatpush1.msra.mxu0 0.0
        %845 = vmatprep.subr.mxu0 0.0
        %846 = vmatpush1.msra.mxu0 0.0
        %847 = vmatprep.subr.mxu0 0.0
        %848 = vmatpush1.msra.mxu0 0.0
        %849 = vmatprep.subr.mxu0 0.0
        %850 = vmatpush1.msra.mxu0 0.0
        %851 = vmatprep.subr.mxu0 0.0
        %852 = vmatpush1.msra.mxu0 0.0
        %853 = vmatprep.subr.mxu0 0.0
        %854 = vmatpush1.msra.mxu0 0.0
        %855 = vmatprep.subr.mxu0 0.0
        %856 = vmatpush1.msra.mxu0 0.0
        %857 = vmatprep.subr.mxu0 0.0
        %858 = vmatpush1.msra.mxu0 0.0
        %859 = vmatprep.subr.mxu0 0.0
        %860 = vmatpush1.msra.mxu0 0.0
        %861 = vmatprep.subr.mxu0 0.0
        %862 = vmatpush1.msra.mxu0 0.0
        %863 = vmatprep.subr.mxu0 0.0
        %864 = vmatpush1.msra.mxu0 0.0
        %865 = vmatprep.subr.mxu0 0.0
        %866 = vmatpush1.msra.mxu0 0.0
        %867 = vmatprep.mubr.f32.mxu0 0.0
        %868 = vmatmul.mubr.f32.gmra.mrb[0].mxu0 %v777
        %v869 = vpop.f32.mrb[0].mxu0
        %v870 = vadd.f32 %v801, %v869
        %v871 = vpop.f32.mrb[0].mxu0
        %872 = vdwg.mxu0
        %v873 = vmax.f32 %v870, 0.0
        %s874 = scalar_lea.vmem [#allocation8], 384
        %v875 = vld [vmem:[%s874] sm:$0xff]
        %v876 = vld [vmem:[%s874 + $0x8] sm:$0xff]
        %v877 = vld [vmem:[%s874 + $0x10] sm:$0xff]
        %v878 = vld [vmem:[%s874 + $0x18] sm:$0xff]
        %v879 = vld [vmem:[%s874 + $0x20] sm:$0xff]
        %v880 = vld [vmem:[%s874 + $0x28] sm:$0xff]
        %v881 = vld [vmem:[%s874 + $0x30] sm:$0xff]
        %v882 = vld [vmem:[%s874 + $0x38] sm:$0xff]
        %v883 = vld [vmem:[%s874 + $0x40] sm:$0xff]
        %v884 = vld [vmem:[%s874 + $0x48] sm:$0xff]
        %v885 = vld [vmem:[%s874 + $0x50] sm:$0xff]
        %v886 = vld [vmem:[%s874 + $0x58] sm:$0xff]
        %v887 = vld [vmem:[%s874 + $0x60] sm:$0xff]
        %v888 = vld [vmem:[%s874 + $0x68] sm:$0xff]
        %v889 = vld [vmem:[%s874 + $0x70] sm:$0xff]
        %v890 = vld [vmem:[%s874 + $0x78] sm:$0xff]
        %s891 = scalar_lea.vmem %s5, 3
        %v892 = vld [vmem:[%s891] sm:$0x1]
        %v894 = vlaneseq
        %v895 = vshrl.u32 %v894, 7
        %v896 = vsub.s32 0, %v895
        %v897 = vrot.slane %v892, %v896
        %899 = vmatprep.subr.mxu0 0.0
        %900 = vmatpush1.msra.mxu0 %v875
        %901 = vmatprep.subr.mxu0 0.0
        %902 = vmatpush1.msra.mxu0 %v876
        %903 = vmatprep.subr.mxu0 0.0
        %904 = vmatpush1.msra.mxu0 %v877
        %905 = vmatprep.subr.mxu0 0.0
        %906 = vmatpush1.msra.mxu0 %v878
        %907 = vmatprep.subr.mxu0 0.0
        %908 = vmatpush1.msra.mxu0 %v879
        %909 = vmatprep.subr.mxu0 0.0
        %910 = vmatpush1.msra.mxu0 %v880
        %911 = vmatprep.subr.mxu0 0.0
        %912 = vmatpush1.msra.mxu0 %v881
        %913 = vmatprep.subr.mxu0 0.0
        %914 = vmatpush1.msra.mxu0 %v882
        %915 = vmatprep.subr.mxu0 0.0
        %916 = vmatpush1.msra.mxu0 %v883
        %917 = vmatprep.subr.mxu0 0.0
        %918 = vmatpush1.msra.mxu0 %v884
        %919 = vmatprep.subr.mxu0 0.0
        %920 = vmatpush1.msra.mxu0 %v885
        %921 = vmatprep.subr.mxu0 0.0
        %922 = vmatpush1.msra.mxu0 %v886
        %923 = vmatprep.subr.mxu0 0.0
        %924 = vmatpush1.msra.mxu0 %v887
        %925 = vmatprep.subr.mxu0 0.0
        %926 = vmatpush1.msra.mxu0 %v888
        %927 = vmatprep.subr.mxu0 0.0
        %928 = vmatpush1.msra.mxu0 %v889
        %929 = vmatprep.subr.mxu0 0.0
        %930 = vmatpush1.msra.mxu0 %v890
        %931 = vmatprep.subr.mxu0 0.0
        %932 = vmatpush1.msra.mxu0 0.0
        %933 = vmatprep.subr.mxu0 0.0
        %934 = vmatpush1.msra.mxu0 0.0
        %935 = vmatprep.subr.mxu0 0.0
        %936 = vmatpush1.msra.mxu0 0.0
        %937 = vmatprep.subr.mxu0 0.0
        %938 = vmatpush1.msra.mxu0 0.0
        %939 = vmatprep.subr.mxu0 0.0
        %940 = vmatpush1.msra.mxu0 0.0
        %941 = vmatprep.subr.mxu0 0.0
        %942 = vmatpush1.msra.mxu0 0.0
        %943 = vmatprep.subr.mxu0 0.0
        %944 = vmatpush1.msra.mxu0 0.0
        %945 = vmatprep.subr.mxu0 0.0
        %946 = vmatpush1.msra.mxu0 0.0
        %947 = vmatprep.subr.mxu0 0.0
        %948 = vmatpush1.msra.mxu0 0.0
        %949 = vmatprep.subr.mxu0 0.0
        %950 = vmatpush1.msra.mxu0 0.0
        %951 = vmatprep.subr.mxu0 0.0
        %952 = vmatpush1.msra.mxu0 0.0
        %953 = vmatprep.subr.mxu0 0.0
        %954 = vmatpush1.msra.mxu0 0.0
        %955 = vmatprep.subr.mxu0 0.0
        %956 = vmatpush1.msra.mxu0 0.0
        %957 = vmatprep.subr.mxu0 0.0
        %958 = vmatpush1.msra.mxu0 0.0
        %959 = vmatprep.subr.mxu0 0.0
        %960 = vmatpush1.msra.mxu0 0.0
        %961 = vmatprep.subr.mxu0 0.0
        %962 = vmatpush1.msra.mxu0 0.0
        %963 = vmatprep.mubr.f32.mxu0 0.0
        %964 = vmatmul.mubr.f32.gmra.mrb[0].mxu0 %v873
        %v965 = vpop.f32.mrb[0].mxu0
        %v966 = vadd.f32 %v897, %v965
        %v967 = vpop.f32.mrb[0].mxu0
        %968 = vdwg.mxu0
        %v969 = vadd.f32 %v776, %v966
        %v970 = vmax.f32 %v969, 0.0
        %v971 = vld [vmem:[#allocation10] sm:$0xff]
        %v972 = vld [vmem:[#allocation10 + $0x8] sm:$0xff]
        %v973 = vld [vmem:[#allocation10 + $0x10] sm:$0xff]
        %v974 = vld [vmem:[#allocation10 + $0x18] sm:$0xff]
        %v975 = vld [vmem:[#allocation10 + $0x20] sm:$0xff]
        %v976 = vld [vmem:[#allocation10 + $0x28] sm:$0xff]
        %v977 = vld [vmem:[#allocation10 + $0x30] sm:$0xff]
        %v978 = vld [vmem:[#allocation10 + $0x38] sm:$0xff]
        %v979 = vld [vmem:[#allocation10 + $0x40] sm:$0xff]
        %v980 = vld [vmem:[#allocation10 + $0x48] sm:$0xff]
        %v981 = vld [vmem:[#allocation10 + $0x50] sm:$0xff]
        %v982 = vld [vmem:[#allocation10 + $0x58] sm:$0xff]
        %v983 = vld [vmem:[#allocation10 + $0x60] sm:$0xff]
        %v984 = vld [vmem:[#allocation10 + $0x68] sm:$0xff]
        %v985 = vld [vmem:[#allocation10 + $0x70] sm:$0xff]
        %v986 = vld [vmem:[#allocation10 + $0x78] sm:$0xff]
        %v987 = vld [vmem:[%s7] sm:$0x1]
        %v989 = vlaneseq
        %v990 = vshrl.u32 %v989, 7
        %v991 = vsub.s32 0, %v990
        %v992 = vrot.slane %v987, %v991
        %994 = vmatprep.subr.mxu0 0.0
        %995 = vmatpush1.msra.mxu0 %v971
        %996 = vmatprep.subr.mxu0 0.0
        %997 = vmatpush1.msra.mxu0 %v972
        %998 = vmatprep.subr.mxu0 0.0
        %999 = vmatpush1.msra.mxu0 %v973
        %1000 = vmatprep.subr.mxu0 0.0
        %1001 = vmatpush1.msra.mxu0 %v974
        %1002 = vmatprep.subr.mxu0 0.0
        %1003 = vmatpush1.msra.mxu0 %v975
        %1004 = vmatprep.subr.mxu0 0.0
        %1005 = vmatpush1.msra.mxu0 %v976
        %1006 = vmatprep.subr.mxu0 0.0
        %1007 = vmatpush1.msra.mxu0 %v977
        %1008 = vmatprep.subr.mxu0 0.0
        %1009 = vmatpush1.msra.mxu0 %v978
        %1010 = vmatprep.subr.mxu0 0.0
        %1011 = vmatpush1.msra.mxu0 %v979
        %1012 = vmatprep.subr.mxu0 0.0
        %1013 = vmatpush1.msra.mxu0 %v980
        %1014 = vmatprep.subr.mxu0 0.0
        %1015 = vmatpush1.msra.mxu0 %v981
        %1016 = vmatprep.subr.mxu0 0.0
        %1017 = vmatpush1.msra.mxu0 %v982
        %1018 = vmatprep.subr.mxu0 0.0
        %1019 = vmatpush1.msra.mxu0 %v983
        %1020 = vmatprep.subr.mxu0 0.0
        %1021 = vmatpush1.msra.mxu0 %v984
        %1022 = vmatprep.subr.mxu0 0.0
        %1023 = vmatpush1.msra.mxu0 %v985
        %1024 = vmatprep.subr.mxu0 0.0
        %1025 = vmatpush1.msra.mxu0 %v986
        %1026 = vmatprep.subr.mxu0 0.0
        %1027 = vmatpush1.msra.mxu0 0.0
        %1028 = vmatprep.subr.mxu0 0.0
        %1029 = vmatpush1.msra.mxu0 0.0
        %1030 = vmatprep.subr.mxu0 0.0
        %1031 = vmatpush1.msra.mxu0 0.0
        %1032 = vmatprep.subr.mxu0 0.0
        %1033 = vmatpush1.msra.mxu0 0.0
        %1034 = vmatprep.subr.mxu0 0.0
        %1035 = vmatpush1.msra.mxu0 0.0
        %1036 = vmatprep.subr.mxu0 0.0
        %1037 = vmatpush1.msra.mxu0 0.0
        %1038 = vmatprep.subr.mxu0 0.0
        %1039 = vmatpush1.msra.mxu0 0.0
        %1040 = vmatprep.subr.mxu0 0.0
        %1041 = vmatpush1.msra.mxu0 0.0
        %1042 = vmatprep.subr.mxu0 0.0
        %1043 = vmatpush1.msra.mxu0 0.0
        %1044 = vmatprep.subr.mxu0 0.0
        %1045 = vmatpush1.msra.mxu0 0.0
        %1046 = vmatprep.subr.mxu0 0.0
        %1047 = vmatpush1.msra.mxu0 0.0
        %1048 = vmatprep.subr.mxu0 0.0
        %1049 = vmatpush1.msra.mxu0 0.0
        %1050 = vmatprep.subr.mxu0 0.0
        %1051 = vmatpush1.msra.mxu0 0.0
        %1052 = vmatprep.subr.mxu0 0.0
        %1053 = vmatpush1.msra.mxu0 0.0
        %1054 = vmatprep.subr.mxu0 0.0
        %1055 = vmatpush1.msra.mxu0 0.0
        %1056 = vmatprep.subr.mxu0 0.0
        %1057 = vmatpush1.msra.mxu0 0.0
        %1058 = vmatprep.mubr.f32.mxu0 0.0
        %1059 = vmatmul.mubr.f32.gmra.mrb[0].mxu0 %v970
        %v1060 = vpop.f32.mrb[0].mxu0
        %v1061 = vadd.f32 %v992, %v1060
        %v1062 = vpop.f32.mrb[0].mxu0
        %1063 = vdwg.mxu0
        %v1064 = vmul.f32 %v1061, %v1061
        %1065 = vrot.lane.b32.xlu0 %v1064, 64
        %v1066 = vpop.permute.xlu0 %1065
        %v1067 = vadd.f32 %v1064, %v1066
        %v1068 = vrsqrt.pop %v1067
        %v1069 = vmul.f32 %v1067, %v1068
        %vm1070 = vcmp.eq.f32.partialorder %v1067, inf
        %v1071 = vsel %vm1070, %v1067, %v1069
        %vm1072 = vcmp.eq.f32.partialorder %v1067, 0.0
        %v1073 = vand.u32 %v1067, 2147483648
        %v1074 = vsel %vm1072, %v1073, %v1071
        %v1075 = vmax.f32 %v1074, 1e-12
        %v1076 = vrcp.pop %v1075
        %v1077 = vmul.f32 1.0, %v1076
        %v1078 = vlaneseq
        %v1079 = vand.u32 %v1078, 127
        %v1080 = vand.u32 %v1079, 32
        %vm1081 = vcmp.ne.s32.totalorder %v1080, 0
        %v1082 = vmul.f32 %v1061, %v1077
        %v1083 = vsel %vm1081, 1, 0
        %vm1084 = vcmp.eq.s32.totalorder %v1083, 1
        %v1085 = vsel %vm1084, %v1082, %v1061
        %1086 = vst [vmem:[%s400] sm:$0xff] %v1085
        %s1087 = sand.u32 %s215, 1
        %s1088 = scalar_lea.sflag [#allocation4], %s1087
        %s1089 = sand.u32 %s215, 1
        %s1090 = smul.addr %s1089, 8
        %s1091 = scalar_lea.vmem [#allocation11], %s1090
        // Predicated region
        $region73: #{tpu_custom_call.1} parent=51 // pred_check
          %p1092 = pneg %p225
        $region74: #{tpu_custom_call.1} parent=51 // pred_check_branch
          %1094 = sbr.rel (%p1092) target = $region76
        $region75: #{tpu_custom_call.1} parent=51 // pred_region
          %s1096 = ssub.s32 128, 128
          %1097 = vsyncadd %s1088, %s1096
          %s1098 = smul.addr %s29, 128
          %s1099 = scalar_lea.hbm %s8, %s1098
          %s1101 = sshll.u32 %s1091, 4
          %s1102 = int_to_ptr.vmem [resolvable:$true] %s1101
          %1104 = dma.vmem_to_hbm [thread:$0]  %s1102, 128, %s1099, %s1088
        $region76: #{tpu_custom_call.1} parent=51 // pred_fallthru
          _
      $region52: #{tpu_custom_call.1} parent=5 // pred_fallthru
        _
      %p1105 = scmp.le.s32.totalorder 2, %s24
      // Predicated region
      $region77: #{tpu_custom_call.1} parent=5 // pred_check
        %p1106 = pneg %p1105
      $region78: #{tpu_custom_call.1} parent=5 // pred_check_branch
        %1108 = sbr.rel (%p1106) target = $region80
      $region79: #{tpu_custom_call.1} parent=5 // pred_region
        %s1109 = ssub.s32 %s24, 2
        // Predicated region
        $region81: #{tpu_custom_call.1} parent=79 // pred_check
          %p1110 = pneg %p231
        $region82: #{tpu_custom_call.1} parent=79 // pred_check_branch
          %1112 = sbr.rel (%p1110) target = $region84
        $region83: #{tpu_custom_call.1} parent=79 // pred_region
          %s1113 = sand.u32 %s216, 1
          %s1114 = scalar_lea.sflag [#allocation4], %s1113
          %s1115 = sand.u32 %s216, 1
          %s1116 = smul.addr %s1115, 8
          %s1117 = scalar_lea.vmem [#allocation11], %s1116
          %1118 = dma.done %s1114, 128
        $region84: #{tpu_custom_call.1} parent=79 // pred_fallthru
          _
      $region80: #{tpu_custom_call.1} parent=5 // pred_fallthru
        _
    $region6: #{tpu_custom_call.1} parent=1 // loop_footer
      %s28 = sadd.s32 1, %s24
    $region7: #{tpu_custom_call.1} parent=1 // loop_footer_branch
      %23 = sbr.rel target = $region3
    $region8: #{tpu_custom_call.1} parent=1 // loop_exit
      _
    %1119 = vsyncpa [#allocation3], 1
    %s1120 = scalar_lea.sflag [#allocation3], 1
    %1121 = vsyncpa %s1120, 1
    %1122 = vsyncpa [#allocation6], 1
    %s1123 = scalar_lea.sflag [#allocation6], 1
    %1124 = vsyncpa %s1123, 1
    %1125 = vsyncpa [#allocation9], 1
    %1126 = vsyncpa [#allocation4], 1
    %s1127 = scalar_lea.sflag [#allocation4], 1
    %1128 = vsyncpa %s1127, 1

</llo_original>
